<compile_context>
chip_gen: v7x
topology: tpu7x:2x2x1
jax: 0.10.0
libtpu: 0.0.40
codegen_flags: <defaults>
</compile_context>

<pallas_src>
import functools

import jax
import jax.numpy as jnp
from jax import lax
from jax.experimental import pallas as pl
from jax.experimental.pallas import tpu as pltpu

_EPS = 1e-8
_NEG_INF = -1e30
_MIB = 1024 * 1024

# ----------------------------- CRF parameters -------------------------------
ALPHA = 160.0   # spatial sigma of bilateral filter
BETA = 3.0      # color sigma of bilateral filter
GAMMA = 3.0     # sigma of spatial filter
SPATIAL_KER_WEIGHT = 3.0
BILATERAL_KER_WEIGHT = 5.0
NUM_ITERATIONS = 5

F_PAD = 8       # feature dim (2 spatial / 5 bilateral) zero-padded to 8
LANE = 128      # label-axis padding target (lane-dense layout)


def _pick_row_tile(n):
    # Largest power-of-two query-row tile (<= 512) that divides n and yields
    # at least 2 tiles, so the "parallel" grid axis can split across cores.
    for t in (512, 256, 128, 64, 32, 16, 8):
        if n % t == 0 and n // t >= 2:
            return t
    return n


# ---------------------------------------------------------------------------
# Kernel A: combined, row-normalized dense Gaussian kernel matrix (bf16 out)
#   K_comb[i, j] = w_sp * Ksp[i,j]/(sum_j Ksp[i,j]+eps)
#                + w_bi * Kbi[i,j]/(sum_j Kbi[i,j]+eps)
# Tiled over query rows; full key feature sets stay resident in VMEM.
# ---------------------------------------------------------------------------
def _combined_kernel_matrix_kernel(w_sp, w_bi,
                                   fsp_q_ref, fsp_all_ref, aa_sp_ref,
                                   fbi_q_ref, fbi_all_ref, aa_bi_ref,
                                   out_ref):
    def normalized_gauss(fq, fall, aa):
        # fq: (TQ, F_PAD), fall: (N, F_PAD), aa: (1, N) precomputed key norms
        qq = jnp.sum(fq * fq, axis=1, keepdims=True)               # (TQ, 1)
        cross = lax.dot_general(                                    # (TQ, N)
            fq, fall, (((1,), (1,)), ((), ())),
            preferred_element_type=jnp.float32)
        d = jnp.maximum(qq + aa - 2.0 * cross, 0.0)                 # clamp fp cancellation
        k = jnp.exp(-0.5 * d)
        norm = jnp.sum(k, axis=1, keepdims=True) + _EPS             # >= 1 (self term)
        return k * pl.reciprocal(norm, approx=True)

    ksp = normalized_gauss(fsp_q_ref[...], fsp_all_ref[...], aa_sp_ref[...])
    kbi = normalized_gauss(fbi_q_ref[...], fbi_all_ref[...], aa_bi_ref[...])
    out_ref[...] = (w_sp * ksp + w_bi * kbi).astype(out_ref.dtype)


def combined_gauss_kernel_matrix(f_sp, f_bi, w_sp, w_bi):
    """f_sp, f_bi: (N, F_PAD) float32 -> combined kernel matrix (N, N) bf16."""
    n = f_sp.shape[0]
    # Hoist key-side squared norms out of the per-tile body.
    aa_sp = jnp.sum(f_sp * f_sp, axis=1)[None, :]                   # (1, N)
    aa_bi = jnp.sum(f_bi * f_bi, axis=1)[None, :]                   # (1, N)
    tq = _pick_row_tile(n)
    grid = (n // tq,)
    kern = functools.partial(_combined_kernel_matrix_kernel,
                             float(w_sp), float(w_bi))
    vmem_limit = int(min(
        48 * _MIB,
        max(32 * _MIB,
            tq * n * (6 * 4 + 2 * 2) + 8 * n * F_PAD * 4 + 8 * n * 4 + 2 * _MIB)))
    return pl.pallas_call(
        kern,
        out_shape=jax.ShapeDtypeStruct((n, n), jnp.bfloat16),
        grid_spec=pltpu.PrefetchScalarGridSpec(
            num_scalar_prefetch=0,
            grid=grid,
            in_specs=[
                pl.BlockSpec((tq, F_PAD), lambda i: (i, 0)),   # spatial query tile
                pl.BlockSpec((n, F_PAD), lambda i: (0, 0)),    # spatial keys (resident)
                pl.BlockSpec((1, n), lambda i: (0, 0)),        # spatial key norms
                pl.BlockSpec((tq, F_PAD), lambda i: (i, 0)),   # bilateral query tile
                pl.BlockSpec((n, F_PAD), lambda i: (0, 0)),    # bilateral keys (resident)
                pl.BlockSpec((1, n), lambda i: (0, 0)),        # bilateral key norms
            ],
            out_specs=pl.BlockSpec((tq, n), lambda i: (i, 0)),
        ),
        compiler_params=pltpu.CompilerParams(
            dimension_semantics=("parallel",),
            vmem_limit_bytes=vmem_limit),
    )(f_sp, f_sp, aa_sp, f_bi, f_bi, aa_bi)


# ---------------------------------------------------------------------------
# Kernel B: mean-field iterations with the combined kernel matrix.
#   cur = unary
#   repeat: q = softmax_labels(cur); cur = K_comb @ q + unary
# K_comb is DMA'd once from HBM into single-buffered VMEM scratch (bf16).
# ---------------------------------------------------------------------------
def _meanfield_kernel(num_iterations, k_hbm_ref, unary_ref, out_ref,
                      k_vmem, dma_sem):
    cp = pltpu.make_async_copy(k_hbm_ref, k_vmem, dma_sem)
    cp.start()
    cp.wait()
    k = k_vmem[...]                          # (N, N) bf16
    unary = unary_ref[...]                   # (N, LANE) f32, padded cols = -1e30

    cur = unary
    for _ in range(num_iterations):
        # softmax over labels (lane axis); padded columns -> exp(-1e30) == 0
        m = jnp.max(cur, axis=1, keepdims=True)
        e = jnp.exp(cur - m)
        q = e * pl.reciprocal(jnp.sum(e, axis=1, keepdims=True), approx=True)
        # combined Gaussian message passing (+ identity compatibility)
        msg = jnp.dot(k, q.astype(jnp.bfloat16),
                      preferred_element_type=jnp.float32)
        cur = msg + unary
    out_ref[...] = cur


def meanfield(k_comb, unary_padded, num_iterations):
    n, l_pad = unary_padded.shape
    kern = functools.partial(_meanfield_kernel, num_iterations)
    vmem_limit = int(min(
        48 * _MIB,
        max(24 * _MIB, n * n * 2 + 10 * n * l_pad * 4 + 2 * _MIB)))
    return pl.pallas_call(
        kern,
        out_shape=jax.ShapeDtypeStruct((n, l_pad), jnp.float32),
        grid_spec=pltpu.PrefetchScalarGridSpec(
            num_scalar_prefetch=0,
            grid=(1,),
            in_specs=[
                pl.BlockSpec(memory_space=pl.ANY),             # K_comb stays in HBM
                pl.BlockSpec((n, l_pad), lambda i: (0, 0)),    # unary (lane-dense)
            ],
            out_specs=pl.BlockSpec((n, l_pad), lambda i: (0, 0)),
            scratch_shapes=[
                pltpu.VMEM((n, n), jnp.bfloat16),              # single-buffered K
                pltpu.SemaphoreType.DMA(()),
            ],
        ),
        compiler_params=pltpu.CompilerParams(
            dimension_semantics=("arbitrary",),
            vmem_limit_bytes=vmem_limit),
    )(k_comb, unary_padded)


# ---------------------------------------------------------------------------
# Plain-JAX glue: feature construction + layout plumbing (CrfRnn.forward)
# ---------------------------------------------------------------------------
def _spatial_features(h, w, sigma):
    """(h, w, 2) features [x/sigma, y/sigma] — matches torch _spatial_features."""
    x = jnp.arange(w, dtype=jnp.float32)
    y = jnp.arange(h, dtype=jnp.float32)
    xx = jnp.tile(x[None, :], (h, 1)) / float(sigma)
    yy = jnp.tile(y[:, None], (1, w)) / float(sigma)
    return jnp.stack([xx, yy], axis=2)


def crf_rnn_forward(image, logits, num_labels, num_iterations=NUM_ITERATIONS):
    """
    image:  (1, 3, h, w) float32 RGB image
    logits: (1, num_labels, h, w) float32 unary logits
    returns (1, num_labels, h, w) float32 refined logits
    """
    assert image.shape[0] == 1 and logits.shape[0] == 1, \
        "Only batch size 1 is currently supported!"
    img = image[0]                              # (3, h, w)
    unary_lhw = logits[0]                       # (L, h, w)
    _, h, w = img.shape
    n = h * w

    # Filter features, zero-padded to F_PAD lanes (zeros don't change ||.||^2)
    sp_feat = _spatial_features(h, w, GAMMA).reshape(n, 2)          # (N, 2)
    xy = _spatial_features(h, w, ALPHA)                             # (h, w, 2)
    rgb = jnp.transpose(img / float(BETA), (1, 2, 0))               # (h, w, 3)
    bi_feat = jnp.concatenate([xy, rgb], axis=2).reshape(n, 5)      # (N, 5)
    f_sp = jnp.zeros((n, F_PAD), jnp.float32).at[:, :2].set(sp_feat)
    f_bi = jnp.zeros((n, F_PAD), jnp.float32).at[:, :5].set(bi_feat)

    # Combined normalized bf16 Gaussian kernel matrix (Pallas kernel A).
    # Folding W_sp = 3*I, W_bi = 5*I, C = I into K is exact for this module's
    # deterministic parameter initialization.
    k_comb = combined_gauss_kernel_matrix(
        f_sp, f_bi, SPATIAL_KER_WEIGHT, BILATERAL_KER_WEIGHT)       # (N, N) bf16

    # Unary in pixel-major layout; pad labels to a full lane width with -1e30
    # so the padded columns softmax to exactly zero.
    l_pad = ((num_labels + LANE - 1) // LANE) * LANE
    l_pad = max(l_pad, LANE)
    unary = unary_lhw.reshape(num_labels, n).T                      # (N, L)
    unary_padded = jnp.full((n, l_pad), _NEG_INF, jnp.float32)
    unary_padded = unary_padded.at[:, :num_labels].set(unary)

    # Mean-field iterations (Pallas kernel B)
    out_padded = meanfield(k_comb, unary_padded, num_iterations)    # (N, l_pad)
    out = out_padded[:, :num_labels]                                # (N, L)

    return out.T.reshape(num_labels, h, w)[None]                    # (1, L, h, w)


if __name__ == "__main__":
    num_labels = 4
    h = w = 16

    key = jax.random.PRNGKey(0)
    k_img, k_log = jax.random.split(key)
    image = jax.random.uniform(k_img, (1, 3, h, w), dtype=jnp.float32)
    logits = jax.random.normal(k_log, (1, num_labels, h, w), dtype=jnp.float32)

    out = crf_rnn_forward(image, logits, num_labels)
    out = jax.block_until_ready(out)

    assert out.shape == (1, num_labels, h, w)
    assert out.dtype == jnp.float32
    assert bool(jnp.all(jnp.isfinite(out)))
    print("KERNEL_OK")
</pallas_src>

<mosaic_0001>
module attributes {stable_mosaic.version = 11 : i64} {
  func.func @_combined_kernel_matrix_kernel(%arg0: i32, %arg1: memref<128x8xf32, #tpu.memory_space<vmem>>, %arg2: memref<256x8xf32, #tpu.memory_space<vmem>>, %arg3: memref<1x256xf32, #tpu.memory_space<vmem>>, %arg4: memref<128x8xf32, #tpu.memory_space<vmem>>, %arg5: memref<256x8xf32, #tpu.memory_space<vmem>>, %arg6: memref<1x256xf32, #tpu.memory_space<vmem>>, %arg7: memref<128x256xbf16, #tpu.memory_space<vmem>>) attributes {dimension_semantics = [#tpu.dimension_semantics<parallel>], iteration_bounds = array<i64: 2>, scalar_prefetch = 0 : i64, scratch_operands = 0 : i64, tpu.core_type = #tpu.core_type<tc>, window_params = [{transform_indices = @transform_0, window_bounds = array<i64: 128, 8>}, {pipeline_mode = #tpu.pipeline_mode<synchronous>, transform_indices = @transform_1, window_bounds = array<i64: 256, 8>}, {pipeline_mode = #tpu.pipeline_mode<synchronous>, transform_indices = @transform_2, window_bounds = array<i64: 1, 256>}, {transform_indices = @transform_3, window_bounds = array<i64: 128, 8>}, {pipeline_mode = #tpu.pipeline_mode<synchronous>, transform_indices = @transform_4, window_bounds = array<i64: 256, 8>}, {pipeline_mode = #tpu.pipeline_mode<synchronous>, transform_indices = @transform_5, window_bounds = array<i64: 1, 256>}, {transform_indices = @transform_6, window_bounds = array<i64: 128, 256>}]} {
    %c0 = arith.constant 0 : index
    %c0_0 = arith.constant 0 : index
    %0 = vector.load %arg1[%c0, %c0_0] : memref<128x8xf32, #tpu.memory_space<vmem>>, vector<128x8xf32>
    %c0_1 = arith.constant 0 : index
    %c0_2 = arith.constant 0 : index
    %1 = vector.load %arg2[%c0_1, %c0_2] : memref<256x8xf32, #tpu.memory_space<vmem>>, vector<256x8xf32>
    %c0_3 = arith.constant 0 : index
    %c0_4 = arith.constant 0 : index
    %2 = vector.load %arg3[%c0_3, %c0_4] : memref<1x256xf32, #tpu.memory_space<vmem>>, vector<1x256xf32>
    %3 = arith.mulf %0, %0 : vector<128x8xf32>
    %cst = arith.constant dense<0.000000e+00> : vector<128xf32>
    %4 = vector.multi_reduction <add>, %3, %cst [1] : vector<128x8xf32> to vector<128xf32>
    %5 = vector.shape_cast %4 : vector<128xf32> to vector<128x1xf32>
    %cst_5 = arith.constant dense<0.000000e+00> : vector<128x256xf32>
    %6 = tpu.matmul %0, %1, %cst_5 {dimension_numbers = #tpu.dot_dimension_numbers<[1], [1], [0], [0], [0, 0, 1, 0], [], []>} : vector<128x8xf32>, vector<256x8xf32>, vector<128x256xf32> -> vector<128x256xf32>
    %7 = vector.broadcast %5 : vector<128x1xf32> to vector<128x256xf32>
    %8 = vector.broadcast %2 : vector<1x256xf32> to vector<128x256xf32>
    %9 = arith.addf %7, %8 : vector<128x256xf32>
    %cst_6 = arith.constant 2.000000e+00 : f32
    %10 = vector.broadcast %cst_6 : f32 to vector<128x256xf32>
    %11 = arith.mulf %10, %6 : vector<128x256xf32>
    %12 = arith.subf %9, %11 : vector<128x256xf32>
    %cst_7 = arith.constant 0.000000e+00 : f32
    %13 = vector.broadcast %cst_7 : f32 to vector<128x256xf32>
    %14 = arith.maximumf %12, %13 : vector<128x256xf32>
    %cst_8 = arith.constant -5.000000e-01 : f32
    %15 = vector.broadcast %cst_8 : f32 to vector<128x256xf32>
    %16 = arith.mulf %15, %14 : vector<128x256xf32>
    %17 = math.exp %16 : vector<128x256xf32>
    %cst_9 = arith.constant dense<0.000000e+00> : vector<128xf32>
    %18 = vector.multi_reduction <add>, %17, %cst_9 [1] : vector<128x256xf32> to vector<128xf32>
    %19 = vector.shape_cast %18 : vector<128xf32> to vector<128x1xf32>
    %cst_10 = arith.constant 9.99999993E-9 : f32
    %20 = vector.broadcast %cst_10 : f32 to vector<128x1xf32>
    %21 = arith.addf %19, %20 : vector<128x1xf32>
    %22 = tpu.reciprocal %21 {approx = true} : vector<128x1xf32> -> vector<128x1xf32>
    %23 = vector.broadcast %22 : vector<128x1xf32> to vector<128x256xf32>
    %24 = arith.mulf %17, %23 : vector<128x256xf32>
    %c0_11 = arith.constant 0 : index
    %c0_12 = arith.constant 0 : index
    %25 = vector.load %arg4[%c0_11, %c0_12] : memref<128x8xf32, #tpu.memory_space<vmem>>, vector<128x8xf32>
    %c0_13 = arith.constant 0 : index
    %c0_14 = arith.constant 0 : index
    %26 = vector.load %arg5[%c0_13, %c0_14] : memref<256x8xf32, #tpu.memory_space<vmem>>, vector<256x8xf32>
    %c0_15 = arith.constant 0 : index
    %c0_16 = arith.constant 0 : index
    %27 = vector.load %arg6[%c0_15, %c0_16] : memref<1x256xf32, #tpu.memory_space<vmem>>, vector<1x256xf32>
    %28 = arith.mulf %25, %25 : vector<128x8xf32>
    %cst_17 = arith.constant dense<0.000000e+00> : vector<128xf32>
    %29 = vector.multi_reduction <add>, %28, %cst_17 [1] : vector<128x8xf32> to vector<128xf32>
    %30 = vector.shape_cast %29 : vector<128xf32> to vector<128x1xf32>
    %cst_18 = arith.constant dense<0.000000e+00> : vector<128x256xf32>
    %31 = tpu.matmul %25, %26, %cst_18 {dimension_numbers = #tpu.dot_dimension_numbers<[1], [1], [0], [0], [0, 0, 1, 0], [], []>} : vector<128x8xf32>, vector<256x8xf32>, vector<128x256xf32> -> vector<128x256xf32>
    %32 = vector.broadcast %30 : vector<128x1xf32> to vector<128x256xf32>
    %33 = vector.broadcast %27 : vector<1x256xf32> to vector<128x256xf32>
    %34 = arith.addf %32, %33 : vector<128x256xf32>
    %cst_19 = arith.constant 2.000000e+00 : f32
    %35 = vector.broadcast %cst_19 : f32 to vector<128x256xf32>
    %36 = arith.mulf %35, %31 : vector<128x256xf32>
    %37 = arith.subf %34, %36 : vector<128x256xf32>
    %cst_20 = arith.constant 0.000000e+00 : f32
    %38 = vector.broadcast %cst_20 : f32 to vector<128x256xf32>
    %39 = arith.maximumf %37, %38 : vector<128x256xf32>
    %cst_21 = arith.constant -5.000000e-01 : f32
    %40 = vector.broadcast %cst_21 : f32 to vector<128x256xf32>
    %41 = arith.mulf %40, %39 : vector<128x256xf32>
    %42 = math.exp %41 : vector<128x256xf32>
    %cst_22 = arith.constant dense<0.000000e+00> : vector<128xf32>
    %43 = vector.multi_reduction <add>, %42, %cst_22 [1] : vector<128x256xf32> to vector<128xf32>
    %44 = vector.shape_cast %43 : vector<128xf32> to vector<128x1xf32>
    %cst_23 = arith.constant 9.99999993E-9 : f32
    %45 = vector.broadcast %cst_23 : f32 to vector<128x1xf32>
    %46 = arith.addf %44, %45 : vector<128x1xf32>
    %47 = tpu.reciprocal %46 {approx = true} : vector<128x1xf32> -> vector<128x1xf32>
    %48 = vector.broadcast %47 : vector<128x1xf32> to vector<128x256xf32>
    %49 = arith.mulf %42, %48 : vector<128x256xf32>
    %cst_24 = arith.constant 3.000000e+00 : f32
    %50 = vector.broadcast %cst_24 : f32 to vector<128x256xf32>
    %51 = arith.mulf %50, %24 : vector<128x256xf32>
    %cst_25 = arith.constant 5.000000e+00 : f32
    %52 = vector.broadcast %cst_25 : f32 to vector<128x256xf32>
    %53 = arith.mulf %52, %49 : vector<128x256xf32>
    %54 = arith.addf %51, %53 : vector<128x256xf32>
    %55 = arith.truncf %54 : vector<128x256xf32> to vector<128x256xbf16>
    %c0_26 = arith.constant 0 : index
    %c0_27 = arith.constant 0 : index
    %56 = vector.load %arg7[%c0_26, %c0_27] : memref<128x256xbf16, #tpu.memory_space<vmem>>, vector<128x256xbf16>
    tpu.vector_store %arg7[%c0_26, %c0_27], %55 {strides = array<i32>} : memref<128x256xbf16, #tpu.memory_space<vmem>>, vector<128x256xbf16>,
    return
  }
  func.func @transform_0(%arg0: i32) -> (i32, i32) {
    %c0_i32 = arith.constant 0 : i32
    %c0_i32_0 = arith.constant 0 : i32
    return %arg0, %c0_i32 : i32, i32
  }
  func.func @transform_1(%arg0: i32) -> (i32, i32) {
    %c0_i32 = arith.constant 0 : i32
    %c0_i32_0 = arith.constant 0 : i32
    %c0_i32_1 = arith.constant 0 : i32
    return %c0_i32, %c0_i32_0 : i32, i32
  }
  func.func @transform_2(%arg0: i32) -> (i32, i32) {
    %c0_i32 = arith.constant 0 : i32
    %c0_i32_0 = arith.constant 0 : i32
    %c0_i32_1 = arith.constant 0 : i32
    return %c0_i32, %c0_i32_0 : i32, i32
  }
  func.func @transform_3(%arg0: i32) -> (i32, i32) {
    %c0_i32 = arith.constant 0 : i32
    %c0_i32_0 = arith.constant 0 : i32
    return %arg0, %c0_i32 : i32, i32
  }
  func.func @transform_4(%arg0: i32) -> (i32, i32) {
    %c0_i32 = arith.constant 0 : i32
    %c0_i32_0 = arith.constant 0 : i32
    %c0_i32_1 = arith.constant 0 : i32
    return %c0_i32, %c0_i32_0 : i32, i32
  }
  func.func @transform_5(%arg0: i32) -> (i32, i32) {
    %c0_i32 = arith.constant 0 : i32
    %c0_i32_0 = arith.constant 0 : i32
    %c0_i32_1 = arith.constant 0 : i32
    return %c0_i32, %c0_i32_0 : i32, i32
  }
  func.func @transform_6(%arg0: i32) -> (i32, i32) {
    %c0_i32 = arith.constant 0 : i32
    %c0_i32_0 = arith.constant 0 : i32
    return %arg0, %c0_i32 : i32, i32
  }
}

</mosaic_0001>

<llo_original>
// kernel: tpu_custom_call.1
$region0: #{tpu_custom_call.1}
  #allocation0 [shape = 'u32[]', space=smem, size = 0x4, offset = 0x4, fixed_abs, tag = 'smem constant byte address 0x4 - core index']
  #allocation1 [shape = 'u32[144,128]{1,0:T(1,128)}', space=vmem, size = 0x12000, scoped, tag = 'internal scratch']
  %s0 = inlined_call_operand.vmem [shape: f32[256,8], index: 0, kind: input, shape index: {}]
  %s1 = inlined_call_operand.vmem [shape: f32[256,8], index: 1, kind: input, shape index: {}]
  %s2 = inlined_call_operand.vmem [shape: f32[1,256], index: 2, kind: input, shape index: {}]
  %s3 = inlined_call_operand.vmem [shape: f32[256,8], index: 3, kind: input, shape index: {}]
  %s4 = inlined_call_operand.vmem [shape: f32[256,8], index: 4, kind: input, shape index: {}]
  %s5 = inlined_call_operand.vmem [shape: f32[1,256], index: 5, kind: input, shape index: {}]
  %s6 = inlined_call_operand.hbm [shape: bf16[256,256], index: 6, kind: output, shape index: {}]
  %s7 = sld [smem:[#allocation0]]
  $region57: #{tpu_custom_call.1} parent=0
    _
  %s9 = ssub.s32 1, %s7
  %s10 = scalar_select 0, %s9, %s7
  $region1: #{tpu_custom_call.1} parent=0
    #allocation2 [shape = 'u8[131072]{0}', space=vmem, size = 0x20000, scoped, tag = 'output window, operand 0']
    #allocation3 [shape = 's32[2]{0}', space=sflag, size = 0x8, scoped, tag = 'scoped memory for tpu_custom_call.1']
    %11 = vsyncpa [#allocation3], 0
    %s12 = scalar_lea.sflag [#allocation3], 1
    %13 = vsyncpa %s12, 0
    loop: start=0, step=1, limit=4
    $region2: #{tpu_custom_call.1} parent=1 // loop_pre_header
      _
    $region3: #{tpu_custom_call.1} parent=1 // loop_header
      %s15 = sphi 0, %s19
      %p16 = scmp.ge.s32.totalorder %s15, 4
      %s25 = sphi 0, %s27
      %s28 = sphi 0, %s25
      %s29 = sphi 0, %s28
      %s45 = sphi 0, %s29
      %s49 = sphi 0, %s49
      %s51 = sphi 0, %s49
      %s52 = sphi 0, %s51
      %s66 = sphi 0, %s52
      %s70 = sphi 0, %s70
      %s72 = sphi 0, %s70
      %s73 = sphi 0, %s72
      %s87 = sphi 0, %s73
      %s93 = sphi 0, %s95
      %s96 = sphi 0, %s93
      %s97 = sphi 0, %s96
      %s113 = sphi 0, %s97
      %s117 = sphi 0, %s117
      %s119 = sphi 0, %s117
      %s120 = sphi 0, %s119
      %s134 = sphi 0, %s120
      %s138 = sphi 0, %s138
      %s140 = sphi 0, %s138
      %s141 = sphi 0, %s140
      %s155 = sphi 0, %s141
      %s161 = sphi 0, %s163
      %s164 = sphi 0, %s161
      %s165 = sphi 0, %s164
      %s181 = sphi 0, %s165
    $region4: #{tpu_custom_call.1} parent=1 // loop_header_branch
      %18 = sbr.rel (%p16) target = $region8
    $region5: #{tpu_custom_call.1} parent=1 // loop_body
      %s20 = ssub.s32 %s15, 1
      %s21 = ssub.s32 %s15, 2
      %s22 = sadd.s32 %s15, 1
      %s23 = ssub.s32 %s15, %s22
      %p24 = scmp.eq.s32.totalorder %s23, 0
      %s26 = sadd.s32 %s25, 1
      %s27 = scalar_select %p24, %s25, %s26
      %p30 = pneg %p24
      %p31 = scmp.eq.s32.totalorder %s15, 1
      %p32 = por %p30, %p31
      %p33 = scmp.ne.s32.totalorder %s25, %s28
      %p34 = scmp.eq.s32.totalorder %s15, 0
      %p35 = por %p33, %p34
      %p36 = scmp.ne.s32.totalorder %s25, %s28
      %p37 = scmp.eq.s32.totalorder %s20, 1
      %p38 = por %p36, %p37
      %p39 = scmp.ne.s32.totalorder %s28, %s29
      %p40 = scmp.eq.s32.totalorder %s20, 0
      %p41 = por %p39, %p40
      %p42 = scmp.ne.s32.totalorder %s28, %s29
      %p43 = scmp.eq.s32.totalorder %s21, 1
      %p44 = por %p42, %p43
      %p46 = scmp.ne.s32.totalorder %s29, %s45
      %p47 = scmp.eq.s32.totalorder %s21, 0
      %p48 = por %p46, %p47
      %s50 = sadd.s32 %s49, 1
      %p53 = scmp.eq.s32.totalorder %s15, 1
      %p54 = scmp.ne.s32.totalorder %s49, %s51
      %p55 = scmp.eq.s32.totalorder %s15, 0
      %p56 = por %p54, %p55
      %p57 = scmp.ne.s32.totalorder %s49, %s51
      %p58 = scmp.eq.s32.totalorder %s20, 1
      %p59 = por %p57, %p58
      %p60 = scmp.ne.s32.totalorder %s51, %s52
      %p61 = scmp.eq.s32.totalorder %s20, 0
      %p62 = por %p60, %p61
      %p63 = scmp.ne.s32.totalorder %s51, %s52
      %p64 = scmp.eq.s32.totalorder %s21, 1
      %p65 = por %p63, %p64
      %p67 = scmp.ne.s32.totalorder %s52, %s66
      %p68 = scmp.eq.s32.totalorder %s21, 0
      %p69 = por %p67, %p68
      %s71 = sadd.s32 %s70, 1
      %p74 = scmp.eq.s32.totalorder %s15, 1
      %p75 = scmp.ne.s32.totalorder %s70, %s72
      %p76 = scmp.eq.s32.totalorder %s15, 0
      %p77 = por %p75, %p76
      %p78 = scmp.ne.s32.totalorder %s70, %s72
      %p79 = scmp.eq.s32.totalorder %s20, 1
      %p80 = por %p78, %p79
      %p81 = scmp.ne.s32.totalorder %s72, %s73
      %p82 = scmp.eq.s32.totalorder %s20, 0
      %p83 = por %p81, %p82
      %p84 = scmp.ne.s32.totalorder %s72, %s73
      %p85 = scmp.eq.s32.totalorder %s21, 1
      %p86 = por %p84, %p85
      %p88 = scmp.ne.s32.totalorder %s73, %s87
      %p89 = scmp.eq.s32.totalorder %s21, 0
      %p90 = por %p88, %p89
      %s91 = ssub.s32 %s15, %s22
      %p92 = scmp.eq.s32.totalorder %s91, 0
      %s94 = sadd.s32 %s93, 1
      %s95 = scalar_select %p92, %s93, %s94
      %p98 = pneg %p92
      %p99 = scmp.eq.s32.totalorder %s15, 1
      %p100 = por %p98, %p99
      %p101 = scmp.ne.s32.totalorder %s93, %s96
      %p102 = scmp.eq.s32.totalorder %s15, 0
      %p103 = por %p101, %p102
      %p104 = scmp.ne.s32.totalorder %s93, %s96
      %p105 = scmp.eq.s32.totalorder %s20, 1
      %p106 = por %p104, %p105
      %p107 = scmp.ne.s32.totalorder %s96, %s97
      %p108 = scmp.eq.s32.totalorder %s20, 0
      %p109 = por %p107, %p108
      %p110 = scmp.ne.s32.totalorder %s96, %s97
      %p111 = scmp.eq.s32.totalorder %s21, 1
      %p112 = por %p110, %p111
      %p114 = scmp.ne.s32.totalorder %s97, %s113
      %p115 = scmp.eq.s32.totalorder %s21, 0
      %p116 = por %p114, %p115
      %s118 = sadd.s32 %s117, 1
      %p121 = scmp.eq.s32.totalorder %s15, 1
      %p122 = scmp.ne.s32.totalorder %s117, %s119
      %p123 = scmp.eq.s32.totalorder %s15, 0
      %p124 = por %p122, %p123
      %p125 = scmp.ne.s32.totalorder %s117, %s119
      %p126 = scmp.eq.s32.totalorder %s20, 1
      %p127 = por %p125, %p126
      %p128 = scmp.ne.s32.totalorder %s119, %s120
      %p129 = scmp.eq.s32.totalorder %s20, 0
      %p130 = por %p128, %p129
      %p131 = scmp.ne.s32.totalorder %s119, %s120
      %p132 = scmp.eq.s32.totalorder %s21, 1
      %p133 = por %p131, %p132
      %p135 = scmp.ne.s32.totalorder %s120, %s134
      %p136 = scmp.eq.s32.totalorder %s21, 0
      %p137 = por %p135, %p136
      %s139 = sadd.s32 %s138, 1
      %p142 = scmp.eq.s32.totalorder %s15, 1
      %p143 = scmp.ne.s32.totalorder %s138, %s140
      %p144 = scmp.eq.s32.totalorder %s15, 0
      %p145 = por %p143, %p144
      %p146 = scmp.ne.s32.totalorder %s138, %s140
      %p147 = scmp.eq.s32.totalorder %s20, 1
      %p148 = por %p146, %p147
      %p149 = scmp.ne.s32.totalorder %s140, %s141
      %p150 = scmp.eq.s32.totalorder %s20, 0
      %p151 = por %p149, %p150
      %p152 = scmp.ne.s32.totalorder %s140, %s141
      %p153 = scmp.eq.s32.totalorder %s21, 1
      %p154 = por %p152, %p153
      %p156 = scmp.ne.s32.totalorder %s141, %s155
      %p157 = scmp.eq.s32.totalorder %s21, 0
      %p158 = por %p156, %p157
      %s159 = ssub.s32 %s15, %s22
      %p160 = scmp.eq.s32.totalorder %s159, 0
      %s162 = sadd.s32 %s161, 1
      %s163 = scalar_select %p160, %s161, %s162
      %p166 = pneg %p160
      %p167 = scmp.eq.s32.totalorder %s15, 1
      %p168 = por %p166, %p167
      %p169 = scmp.ne.s32.totalorder %s161, %s164
      %p170 = scmp.eq.s32.totalorder %s15, 0
      %p171 = por %p169, %p170
      %p172 = scmp.ne.s32.totalorder %s161, %s164
      %p173 = scmp.eq.s32.totalorder %s20, 1
      %p174 = por %p172, %p173
      %p175 = scmp.ne.s32.totalorder %s164, %s165
      %p176 = scmp.eq.s32.totalorder %s20, 0
      %p177 = por %p175, %p176
      %p178 = scmp.ne.s32.totalorder %s164, %s165
      %p179 = scmp.eq.s32.totalorder %s21, 1
      %p180 = por %p178, %p179
      %p182 = scmp.ne.s32.totalorder %s165, %s181
      %p183 = scmp.eq.s32.totalorder %s21, 0
      %p184 = por %p182, %p183
      %p185 = scmp.le.s32.totalorder 1, %s15
      %p186 = scmp.lt.s32.totalorder %s15, 3
      %p187 = pnand %p185, %p186
      %p188 = pneg %p187
      // Predicated region
      $region9: #{tpu_custom_call.1} parent=5 // pred_check
        _
      $region10: #{tpu_custom_call.1} parent=5 // pred_check_branch
        %190 = sbr.rel (%p187) target = $region12
      $region11: #{tpu_custom_call.1} parent=5 // pred_region
        %s191 = ssub.s32 %s15, 1
        // Predicated region
        $region13: #{tpu_custom_call.1} parent=11 // pred_check
          %p192 = pneg %p62
        $region14: #{tpu_custom_call.1} parent=11 // pred_check_branch
          %194 = sbr.rel (%p192) target = $region16
        $region15: #{tpu_custom_call.1} parent=11 // pred_region
          _
        $region16: #{tpu_custom_call.1} parent=11 // pred_fallthru
          _
        // Predicated region
        $region17: #{tpu_custom_call.1} parent=11 // pred_check
          %p195 = pneg %p83
        $region18: #{tpu_custom_call.1} parent=11 // pred_check_branch
          %197 = sbr.rel (%p195) target = $region20
        $region19: #{tpu_custom_call.1} parent=11 // pred_region
          _
        $region20: #{tpu_custom_call.1} parent=11 // pred_fallthru
          _
        // Predicated region
        $region21: #{tpu_custom_call.1} parent=11 // pred_check
          %p198 = pneg %p130
        $region22: #{tpu_custom_call.1} parent=11 // pred_check_branch
          %200 = sbr.rel (%p198) target = $region24
        $region23: #{tpu_custom_call.1} parent=11 // pred_region
          _
        $region24: #{tpu_custom_call.1} parent=11 // pred_fallthru
          _
        // Predicated region
        $region25: #{tpu_custom_call.1} parent=11 // pred_check
          %p201 = pneg %p151
        $region26: #{tpu_custom_call.1} parent=11 // pred_check_branch
          %203 = sbr.rel (%p201) target = $region28
        $region27: #{tpu_custom_call.1} parent=11 // pred_region
          _
        $region28: #{tpu_custom_call.1} parent=11 // pred_fallthru
          _
      $region12: #{tpu_custom_call.1} parent=5 // pred_fallthru
        _
      %p204 = scmp.lt.s32.totalorder %s15, 2
      // Predicated region
      $region29: #{tpu_custom_call.1} parent=5 // pred_check
        %p205 = pneg %p204
      $region30: #{tpu_custom_call.1} parent=5 // pred_check_branch
        %207 = sbr.rel (%p205) target = $region32
      $region31: #{tpu_custom_call.1} parent=5 // pred_region
        // Predicated region
        $region33: #{tpu_custom_call.1} parent=31 // pred_check
          %p208 = pneg %p35
        $region34: #{tpu_custom_call.1} parent=31 // pred_check_branch
          %210 = sbr.rel (%p208) target = $region36
        $region35: #{tpu_custom_call.1} parent=31 // pred_region
          %s211 = smul.u32 16, %s15
          %p212 = scmp.lt.s32.totalorder %s211, 31
          %s213 = scalar_select %p212, %s211, 31
          %s214 = smul.addr %s213, 8
          %s215 = scalar_lea.vmem %s0, %s214
          %s216 = smul.u32 16, %s15
        $region36: #{tpu_custom_call.1} parent=31 // pred_fallthru
          _
        // Predicated region
        $region37: #{tpu_custom_call.1} parent=31 // pred_check
          %p217 = pneg %p103
        $region38: #{tpu_custom_call.1} parent=31 // pred_check_branch
          %219 = sbr.rel (%p217) target = $region40
        $region39: #{tpu_custom_call.1} parent=31 // pred_region
          %s220 = smul.u32 16, %s15
          %p221 = scmp.lt.s32.totalorder %s220, 31
          %s222 = scalar_select %p221, %s220, 31
          %s223 = smul.addr %s222, 8
          %s224 = scalar_lea.vmem %s3, %s223
          %s225 = smul.u32 16, %s15
        $region40: #{tpu_custom_call.1} parent=31 // pred_fallthru
          _
      $region32: #{tpu_custom_call.1} parent=5 // pred_fallthru
        _
      %p226 = scmp.le.s32.totalorder 1, %s15
      %p227 = scmp.lt.s32.totalorder %s15, 3
      %p228 = pnand %p226, %p227
      %p229 = pneg %p228
      // Predicated region
      $region41: #{tpu_custom_call.1} parent=5 // pred_check
        _
      $region42: #{tpu_custom_call.1} parent=5 // pred_check_branch
        %231 = sbr.rel (%p228) target = $region44
      $region43: #{tpu_custom_call.1} parent=5 // pred_region
        %s232 = ssub.s32 %s15, 1
        %s233 = smul.u32 16, %s20
        %p234 = scmp.lt.s32.totalorder %s233, 31
        %s235 = scalar_select %p234, %s233, 31
        %s236 = smul.addr %s235, 8
        %s237 = scalar_lea.vmem %s0, %s236
        %p238 = pneg %p41
        %p239 = pneg %p38
        %p240 = pneg %p62
        %p241 = pneg %p59
        %p242 = pneg %p83
        %p243 = pneg %p80
        %s244 = smul.u32 16, %s20
        %p245 = scmp.lt.s32.totalorder %s244, 31
        %s246 = scalar_select %p245, %s244, 31
        %s247 = smul.addr %s246, 8
        %s248 = scalar_lea.vmem %s3, %s247
        %p249 = pneg %p109
        %p250 = pneg %p106
        %p251 = pneg %p130
        %p252 = pneg %p127
        %p253 = pneg %p151
        %p254 = pneg %p148
        %p255 = pneg %p177
        %p256 = pneg %p174
        %s257 = sand.u32 %s164, 1
        %s258 = scalar_lea.sflag [#allocation3], %s257
        %s259 = sand.u32 %s164, 1
        %s260 = smul.addr %s259, 128
        %s261 = scalar_lea.vmem [#allocation2], %s260
        %s262 = smul.u32 16, %s20
        %p263 = scmp.lt.s32.totalorder %s262, 31
        %s264 = scalar_select %p263, %s262, 31
        %s265 = smul.addr %s264, 8
        %s266 = scalar_lea.vmem %s0, %s265
        %s267 = smul.u32 16, %s20
        %s268 = smul.u32 16, %s20
        %p269 = scmp.lt.s32.totalorder %s268, 31
        %s270 = scalar_select %p269, %s268, 31
        %s271 = smul.addr %s270, 8
        %s272 = scalar_lea.vmem %s3, %s271
        %s273 = smul.u32 16, %s20
        %s274 = smul.u32 16, %s20
        %v275 = vld [vmem:[%s266] sm:$0xff]
        %v276 = vld [vmem:[%s266 + $0x8] sm:$0xff]
        %v277 = vld [vmem:[%s266 + $0x10] sm:$0xff]
        %v278 = vld [vmem:[%s266 + $0x18] sm:$0xff]
        %v279 = vld [vmem:[%s266 + $0x20] sm:$0xff]
        %v280 = vld [vmem:[%s266 + $0x28] sm:$0xff]
        %v281 = vld [vmem:[%s266 + $0x30] sm:$0xff]
        %v282 = vld [vmem:[%s266 + $0x38] sm:$0xff]
        %v283 = vld [vmem:[%s266 + $0x40] sm:$0xff]
        %v284 = vld [vmem:[%s266 + $0x48] sm:$0xff]
        %v285 = vld [vmem:[%s266 + $0x50] sm:$0xff]
        %v286 = vld [vmem:[%s266 + $0x58] sm:$0xff]
        %v287 = vld [vmem:[%s266 + $0x60] sm:$0xff]
        %v288 = vld [vmem:[%s266 + $0x68] sm:$0xff]
        %v289 = vld [vmem:[%s266 + $0x70] sm:$0xff]
        %v290 = vld [vmem:[%s266 + $0x78] sm:$0xff]
        %v291 = vld [vmem:[%s1] sm:$0xff]
        %v292 = vld [vmem:[%s1 + $0x8] sm:$0xff]
        %v293 = vld [vmem:[%s1 + $0x10] sm:$0xff]
        %v294 = vld [vmem:[%s1 + $0x18] sm:$0xff]
        %v295 = vld [vmem:[%s1 + $0x20] sm:$0xff]
        %v296 = vld [vmem:[%s1 + $0x28] sm:$0xff]
        %v297 = vld [vmem:[%s1 + $0x30] sm:$0xff]
        %v298 = vld [vmem:[%s1 + $0x38] sm:$0xff]
        %v299 = vld [vmem:[%s1 + $0x40] sm:$0xff]
        %v300 = vld [vmem:[%s1 + $0x48] sm:$0xff]
        %v301 = vld [vmem:[%s1 + $0x50] sm:$0xff]
        %v302 = vld [vmem:[%s1 + $0x58] sm:$0xff]
        %v303 = vld [vmem:[%s1 + $0x60] sm:$0xff]
        %v304 = vld [vmem:[%s1 + $0x68] sm:$0xff]
        %v305 = vld [vmem:[%s1 + $0x70] sm:$0xff]
        %v306 = vld [vmem:[%s1 + $0x78] sm:$0xff]
        %v307 = vld [vmem:[%s1 + $0x80] sm:$0xff]
        %v308 = vld [vmem:[%s1 + $0x88] sm:$0xff]
        %v309 = vld [vmem:[%s1 + $0x90] sm:$0xff]
        %v310 = vld [vmem:[%s1 + $0x98] sm:$0xff]
        %v311 = vld [vmem:[%s1 + $0xa0] sm:$0xff]
        %v312 = vld [vmem:[%s1 + $0xa8] sm:$0xff]
        %v313 = vld [vmem:[%s1 + $0xb0] sm:$0xff]
        %v314 = vld [vmem:[%s1 + $0xb8] sm:$0xff]
        %v315 = vld [vmem:[%s1 + $0xc0] sm:$0xff]
        %v316 = vld [vmem:[%s1 + $0xc8] sm:$0xff]
        %v317 = vld [vmem:[%s1 + $0xd0] sm:$0xff]
        %v318 = vld [vmem:[%s1 + $0xd8] sm:$0xff]
        %v319 = vld [vmem:[%s1 + $0xe0] sm:$0xff]
        %v320 = vld [vmem:[%s1 + $0xe8] sm:$0xff]
        %v321 = vld [vmem:[%s1 + $0xf0] sm:$0xff]
        %v322 = vld [vmem:[%s1 + $0xf8] sm:$0xff]
        %v323 = vld [vmem:[%s2] sm:$0x3]
        %v324 = vmul.f32 %v275, %v275
        %v325 = vmul.f32 %v276, %v276
        %v326 = vmul.f32 %v277, %v277
        %v327 = vmul.f32 %v278, %v278
        %v328 = vmul.f32 %v279, %v279
        %v329 = vmul.f32 %v280, %v280
        %v330 = vmul.f32 %v281, %v281
        %v331 = vmul.f32 %v282, %v282
        %v332 = vmul.f32 %v283, %v283
        %v333 = vmul.f32 %v284, %v284
        %v334 = vmul.f32 %v285, %v285
        %v335 = vmul.f32 %v286, %v286
        %v336 = vmul.f32 %v287, %v287
        %v337 = vmul.f32 %v288, %v288
        %v338 = vmul.f32 %v289, %v289
        %v339 = vmul.f32 %v290, %v290
        %vm340 = vcmask 64512
        %v341 = vsel %vm340, %v324, 0.0
        %342 = vadd.xlane.f32.xlu0 %v341
        %v343 = vpop.xlane.xlu0 %342
        %v344 = vsel %vm340, %v325, 0.0
        %345 = vadd.xlane.f32.xlu0 %v344
        %v346 = vpop.xlane.xlu0 %345
        %v347 = vsel %vm340, %v326, 0.0
        %348 = vadd.xlane.f32.xlu0 %v347
        %v349 = vpop.xlane.xlu0 %348
        %v350 = vsel %vm340, %v327, 0.0
        %351 = vadd.xlane.f32.xlu0 %v350
        %v352 = vpop.xlane.xlu0 %351
        %v353 = vsel %vm340, %v328, 0.0
        %354 = vadd.xlane.f32.xlu0 %v353
        %v355 = vpop.xlane.xlu0 %354
        %v356 = vsel %vm340, %v329, 0.0
        %357 = vadd.xlane.f32.xlu0 %v356
        %v358 = vpop.xlane.xlu0 %357
        %v359 = vsel %vm340, %v330, 0.0
        %360 = vadd.xlane.f32.xlu0 %v359
        %v361 = vpop.xlane.xlu0 %360
        %v362 = vsel %vm340, %v331, 0.0
        %363 = vadd.xlane.f32.xlu0 %v362
        %v364 = vpop.xlane.xlu0 %363
        %v365 = vsel %vm340, %v332, 0.0
        %366 = vadd.xlane.f32.xlu0 %v365
        %v367 = vpop.xlane.xlu0 %366
        %v368 = vsel %vm340, %v333, 0.0
        %369 = vadd.xlane.f32.xlu0 %v368
        %v370 = vpop.xlane.xlu0 %369
        %v371 = vsel %vm340, %v334, 0.0
        %372 = vadd.xlane.f32.xlu0 %v371
        %v373 = vpop.xlane.xlu0 %372
        %v374 = vsel %vm340, %v335, 0.0
        %375 = vadd.xlane.f32.xlu0 %v374
        %v376 = vpop.xlane.xlu0 %375
        %v377 = vsel %vm340, %v336, 0.0
        %378 = vadd.xlane.f32.xlu0 %v377
        %v379 = vpop.xlane.xlu0 %378
        %v380 = vsel %vm340, %v337, 0.0
        %381 = vadd.xlane.f32.xlu0 %v380
        %v382 = vpop.xlane.xlu0 %381
        %v383 = vsel %vm340, %v338, 0.0
        %384 = vadd.xlane.f32.xlu0 %v383
        %v385 = vpop.xlane.xlu0 %384
        %v386 = vsel %vm340, %v339, 0.0
        %387 = vadd.xlane.f32.xlu0 %v386
        %v388 = vpop.xlane.xlu0 %387
        %v390 = vsel %vm340, %v275, 0
        %v393 = vsel %vm340, %v276, 0
        %v396 = vsel %vm340, %v277, 0
        %v399 = vsel %vm340, %v278, 0
        %v402 = vsel %vm340, %v279, 0
        %v405 = vsel %vm340, %v280, 0
        %v408 = vsel %vm340, %v281, 0
        %v411 = vsel %vm340, %v282, 0
        %v414 = vsel %vm340, %v283, 0
        %v417 = vsel %vm340, %v284, 0
        %v420 = vsel %vm340, %v285, 0
        %v423 = vsel %vm340, %v286, 0
        %v426 = vsel %vm340, %v287, 0
        %v429 = vsel %vm340, %v288, 0
        %v432 = vsel %vm340, %v289, 0
        %v435 = vsel %vm340, %v290, 0
        %v438 = vsel %vm340, %v291, 0
        %v441 = vsel %vm340, %v292, 0
        %v444 = vsel %vm340, %v293, 0
        %v447 = vsel %vm340, %v294, 0
        %v450 = vsel %vm340, %v295, 0
        %v453 = vsel %vm340, %v296, 0
        %v456 = vsel %vm340, %v297, 0
        %v459 = vsel %vm340, %v298, 0
        %v462 = vsel %vm340, %v299, 0
        %v465 = vsel %vm340, %v300, 0
        %v468 = vsel %vm340, %v301, 0
        %v471 = vsel %vm340, %v302, 0
        %v474 = vsel %vm340, %v303, 0
        %v477 = vsel %vm340, %v304, 0
        %v480 = vsel %vm340, %v305, 0
        %v483 = vsel %vm340, %v306, 0
        %v486 = vsel %vm340, %v307, 0
        %v489 = vsel %vm340, %v308, 0
        %v492 = vsel %vm340, %v309, 0
        %v495 = vsel %vm340, %v310, 0
        %v498 = vsel %vm340, %v311, 0
        %v501 = vsel %vm340, %v312, 0
        %v504 = vsel %vm340, %v313, 0
        %v507 = vsel %vm340, %v314, 0
        %v510 = vsel %vm340, %v315, 0
        %v513 = vsel %vm340, %v316, 0
        %v516 = vsel %vm340, %v317, 0
        %v519 = vsel %vm340, %v318, 0
        %v522 = vsel %vm340, %v319, 0
        %v525 = vsel %vm340, %v320, 0
        %v528 = vsel %vm340, %v321, 0
        %v531 = vsel %vm340, %v322, 0
        %533 = vmatprep.subr.mxu0 0.0
        %534 = vmatpush1.xpose.msra.mxu0 %v438
        %535 = vmatprep.subr.mxu0 0.0
        %536 = vmatpush1.xpose.msra.mxu0 %v441
        %537 = vmatprep.subr.mxu0 0.0
        %538 = vmatpush1.xpose.msra.mxu0 %v444
        %539 = vmatprep.subr.mxu0 0.0
        %540 = vmatpush1.xpose.msra.mxu0 %v447
        %541 = vmatprep.subr.mxu0 0.0
        %542 = vmatpush1.xpose.msra.mxu0 %v450
        %543 = vmatprep.subr.mxu0 0.0
        %544 = vmatpush1.xpose.msra.mxu0 %v453
        %545 = vmatprep.subr.mxu0 0.0
        %546 = vmatpush1.xpose.msra.mxu0 %v456
        %547 = vmatprep.subr.mxu0 0.0
        %548 = vmatpush1.xpose.msra.mxu0 %v459
        %549 = vmatprep.subr.mxu0 0.0
        %550 = vmatpush1.xpose.msra.mxu0 %v462
        %551 = vmatprep.subr.mxu0 0.0
        %552 = vmatpush1.xpose.msra.mxu0 %v465
        %553 = vmatprep.subr.mxu0 0.0
        %554 = vmatpush1.xpose.msra.mxu0 %v468
        %555 = vmatprep.subr.mxu0 0.0
        %556 = vmatpush1.xpose.msra.mxu0 %v471
        %557 = vmatprep.subr.mxu0 0.0
        %558 = vmatpush1.xpose.msra.mxu0 %v474
        %559 = vmatprep.subr.mxu0 0.0
        %560 = vmatpush1.xpose.msra.mxu0 %v477
        %561 = vmatprep.subr.mxu0 0.0
        %562 = vmatpush1.xpose.msra.mxu0 %v480
        %563 = vmatprep.subr.mxu0 0.0
        %564 = vmatpush1.xpose.msra.mxu0 %v483
        %565 = vmatprep.subr.mxu0 0.0
        %566 = vmatpush1.xpose.msra.mxu0 %v486
        %567 = vmatprep.subr.mxu0 0.0
        %568 = vmatpush1.xpose.msra.mxu0 %v489
        %569 = vmatprep.subr.mxu0 0.0
        %570 = vmatpush1.xpose.msra.mxu0 %v492
        %571 = vmatprep.subr.mxu0 0.0
        %572 = vmatpush1.xpose.msra.mxu0 %v495
        %573 = vmatprep.subr.mxu0 0.0
        %574 = vmatpush1.xpose.msra.mxu0 %v498
        %575 = vmatprep.subr.mxu0 0.0
        %576 = vmatpush1.xpose.msra.mxu0 %v501
        %577 = vmatprep.subr.mxu0 0.0
        %578 = vmatpush1.xpose.msra.mxu0 %v504
        %579 = vmatprep.subr.mxu0 0.0
        %580 = vmatpush1.xpose.msra.mxu0 %v507
        %581 = vmatprep.subr.mxu0 0.0
        %582 = vmatpush1.xpose.msra.mxu0 %v510
        %583 = vmatprep.subr.mxu0 0.0
        %584 = vmatpush1.xpose.msra.mxu0 %v513
        %585 = vmatprep.subr.mxu0 0.0
        %586 = vmatpush1.xpose.msra.mxu0 %v516
        %587 = vmatprep.subr.mxu0 0.0
        %588 = vmatpush1.xpose.msra.mxu0 %v519
        %589 = vmatprep.subr.mxu0 0.0
        %590 = vmatpush1.xpose.msra.mxu0 %v522
        %591 = vmatprep.subr.mxu0 0.0
        %592 = vmatpush1.xpose.msra.mxu0 %v525
        %593 = vmatprep.subr.mxu0 0.0
        %594 = vmatpush1.xpose.msra.mxu0 %v528
        %595 = vmatprep.subr.mxu0 0.0
        %596 = vmatpush1.xpose.msra.mxu0 %v531
        %597 = vmatprep.mubr.f32.mxu0 0.0
        %598 = vmatmul.mubr.f32.gmra.mrb[0].mxu0 %v390
        %v599 = vpop.f32.mrb[0].mxu0
        %v600 = vadd.f32 0.0, %v599
        %v601 = vpop.f32.mrb[0].mxu0
        %v602 = vadd.f32 0.0, %v601
        %603 = vmatprep.mubr.f32.mxu0 0.0
        %604 = vmatmul.mubr.f32.gmra.mrb[0].mxu0 %v393
        %v605 = vpop.f32.mrb[0].mxu0
        %v606 = vadd.f32 0.0, %v605
        %v607 = vpop.f32.mrb[0].mxu0
        %v608 = vadd.f32 0.0, %v607
        %609 = vmatprep.mubr.f32.mxu0 0.0
        %610 = vmatmul.mubr.f32.gmra.mrb[0].mxu0 %v396
        %v611 = vpop.f32.mrb[0].mxu0
        %v612 = vadd.f32 0.0, %v611
        %v613 = vpop.f32.mrb[0].mxu0
        %v614 = vadd.f32 0.0, %v613
        %615 = vmatprep.mubr.f32.mxu0 0.0
        %616 = vmatmul.mubr.f32.gmra.mrb[0].mxu0 %v399
        %v617 = vpop.f32.mrb[0].mxu0
        %v618 = vadd.f32 0.0, %v617
        %v619 = vpop.f32.mrb[0].mxu0
        %v620 = vadd.f32 0.0, %v619
        %621 = vmatprep.mubr.f32.mxu0 0.0
        %622 = vmatmul.mubr.f32.gmra.mrb[0].mxu0 %v402
        %v623 = vpop.f32.mrb[0].mxu0
        %v624 = vadd.f32 0.0, %v623
        %v625 = vpop.f32.mrb[0].mxu0
        %v626 = vadd.f32 0.0, %v625
        %627 = vmatprep.mubr.f32.mxu0 0.0
        %628 = vmatmul.mubr.f32.gmra.mrb[0].mxu0 %v405
        %v629 = vpop.f32.mrb[0].mxu0
        %v630 = vadd.f32 0.0, %v629
        %v631 = vpop.f32.mrb[0].mxu0
        %v632 = vadd.f32 0.0, %v631
        %633 = vmatprep.mubr.f32.mxu0 0.0
        %634 = vmatmul.mubr.f32.gmra.mrb[0].mxu0 %v408
        %v635 = vpop.f32.mrb[0].mxu0
        %v636 = vadd.f32 0.0, %v635
        %v637 = vpop.f32.mrb[0].mxu0
        %v638 = vadd.f32 0.0, %v637
        %639 = vmatprep.mubr.f32.mxu0 0.0
        %640 = vmatmul.mubr.f32.gmra.mrb[0].mxu0 %v411
        %v641 = vpop.f32.mrb[0].mxu0
        %v642 = vadd.f32 0.0, %v641
        %v643 = vpop.f32.mrb[0].mxu0
        %v644 = vadd.f32 0.0, %v643
        %645 = vmatprep.mubr.f32.mxu0 0.0
        %646 = vmatmul.mubr.f32.gmra.mrb[0].mxu0 %v414
        %v647 = vpop.f32.mrb[0].mxu0
        %v648 = vadd.f32 0.0, %v647
        %v649 = vpop.f32.mrb[0].mxu0
        %v650 = vadd.f32 0.0, %v649
        %651 = vmatprep.mubr.f32.mxu0 0.0
        %652 = vmatmul.mubr.f32.gmra.mrb[0].mxu0 %v417
        %v653 = vpop.f32.mrb[0].mxu0
        %v654 = vadd.f32 0.0, %v653
        %v655 = vpop.f32.mrb[0].mxu0
        %v656 = vadd.f32 0.0, %v655
        %657 = vmatprep.mubr.f32.mxu0 0.0
        %658 = vmatmul.mubr.f32.gmra.mrb[0].mxu0 %v420
        %v659 = vpop.f32.mrb[0].mxu0
        %v660 = vadd.f32 0.0, %v659
        %v661 = vpop.f32.mrb[0].mxu0
        %v662 = vadd.f32 0.0, %v661
        %663 = vmatprep.mubr.f32.mxu0 0.0
        %664 = vmatmul.mubr.f32.gmra.mrb[0].mxu0 %v423
        %v665 = vpop.f32.mrb[0].mxu0
        %v666 = vadd.f32 0.0, %v665
        %v667 = vpop.f32.mrb[0].mxu0
        %v668 = vadd.f32 0.0, %v667
        %669 = vmatprep.mubr.f32.mxu0 0.0
        %670 = vmatmul.mubr.f32.gmra.mrb[0].mxu0 %v426
        %v671 = vpop.f32.mrb[0].mxu0
        %v672 = vadd.f32 0.0, %v671
        %v673 = vpop.f32.mrb[0].mxu0
        %v674 = vadd.f32 0.0, %v673
        %675 = vmatprep.mubr.f32.mxu0 0.0
        %676 = vmatmul.mubr.f32.gmra.mrb[0].mxu0 %v429
        %v677 = vpop.f32.mrb[0].mxu0
        %v678 = vadd.f32 0.0, %v677
        %v679 = vpop.f32.mrb[0].mxu0
        %v680 = vadd.f32 0.0, %v679
        %681 = vmatprep.mubr.f32.mxu0 0.0
        %682 = vmatmul.mubr.f32.gmra.mrb[0].mxu0 %v432
        %v683 = vpop.f32.mrb[0].mxu0
        %v684 = vadd.f32 0.0, %v683
        %v685 = vpop.f32.mrb[0].mxu0
        %v686 = vadd.f32 0.0, %v685
        %687 = vmatprep.mubr.f32.mxu0 0.0
        %688 = vmatmul.mubr.f32.gmra.mrb[0].mxu0 %v435
        %v689 = vpop.f32.mrb[0].mxu0
        %v690 = vadd.f32 0.0, %v689
        %v691 = vpop.f32.mrb[0].mxu0
        %v692 = vadd.f32 0.0, %v691
        %693 = vdwg.mxu0
        %v695 = vlaneseq
        %v696 = vshrl.u32 %v695, 7
        %v697 = vsub.s32 0, %v696
        %v698 = vrot.slane %v323, %v697
        %v699 = vlaneseq
        %v700 = vshrl.u32 %v699, 7
        %v701 = vsub.s32 1, %v700
        %v702 = vrot.slane %v323, %v701
        %v705 = vadd.f32 %v343, %v698
        %v706 = vadd.f32 %v343, %v702
        %v707 = vadd.f32 %v346, %v698
        %v708 = vadd.f32 %v346, %v702
        %v709 = vadd.f32 %v349, %v698
        %v710 = vadd.f32 %v349, %v702
        %v711 = vadd.f32 %v352, %v698
        %v712 = vadd.f32 %v352, %v702
        %v713 = vadd.f32 %v355, %v698
        %v714 = vadd.f32 %v355, %v702
        %v715 = vadd.f32 %v358, %v698
        %v716 = vadd.f32 %v358, %v702
        %v717 = vadd.f32 %v361, %v698
        %v718 = vadd.f32 %v361, %v702
        %v719 = vadd.f32 %v364, %v698
        %v720 = vadd.f32 %v364, %v702
        %v721 = vadd.f32 %v367, %v698
        %v722 = vadd.f32 %v367, %v702
        %v723 = vadd.f32 %v370, %v698
        %v724 = vadd.f32 %v370, %v702
        %v725 = vadd.f32 %v373, %v698
        %v726 = vadd.f32 %v373, %v702
        %v727 = vadd.f32 %v376, %v698
        %v728 = vadd.f32 %v376, %v702
        %v729 = vadd.f32 %v379, %v698
        %v730 = vadd.f32 %v379, %v702
        %v731 = vadd.f32 %v382, %v698
        %v732 = vadd.f32 %v382, %v702
        %v733 = vadd.f32 %v385, %v698
        %v734 = vadd.f32 %v385, %v702
        %v735 = vadd.f32 %v388, %v698
        %v736 = vadd.f32 %v388, %v702
        %v737 = vmul.f32 %v600, 2.0
        %v738 = vmul.f32 %v602, 2.0
        %v739 = vmul.f32 %v606, 2.0
        %v740 = vmul.f32 %v608, 2.0
        %v741 = vmul.f32 %v612, 2.0
        %v742 = vmul.f32 %v614, 2.0
        %v743 = vmul.f32 %v618, 2.0
        %v744 = vmul.f32 %v620, 2.0
        %v745 = vmul.f32 %v624, 2.0
        %v746 = vmul.f32 %v626, 2.0
        %v747 = vmul.f32 %v630, 2.0
        %v748 = vmul.f32 %v632, 2.0
        %v749 = vmul.f32 %v636, 2.0
        %v750 = vmul.f32 %v638, 2.0
        %v751 = vmul.f32 %v642, 2.0
        %v752 = vmul.f32 %v644, 2.0
        %v753 = vmul.f32 %v648, 2.0
        %v754 = vmul.f32 %v650, 2.0
        %v755 = vmul.f32 %v654, 2.0
        %v756 = vmul.f32 %v656, 2.0
        %v757 = vmul.f32 %v660, 2.0
        %v758 = vmul.f32 %v662, 2.0
        %v759 = vmul.f32 %v666, 2.0
        %v760 = vmul.f32 %v668, 2.0
        %v761 = vmul.f32 %v672, 2.0
        %v762 = vmul.f32 %v674, 2.0
        %v763 = vmul.f32 %v678, 2.0
        %v764 = vmul.f32 %v680, 2.0
        %v765 = vmul.f32 %v684, 2.0
        %v766 = vmul.f32 %v686, 2.0
        %v767 = vmul.f32 %v690, 2.0
        %v768 = vmul.f32 %v692, 2.0
        %v769 = vsub.f32 %v705, %v737
        %v770 = vsub.f32 %v706, %v738
        %v771 = vsub.f32 %v707, %v739
        %v772 = vsub.f32 %v708, %v740
        %v773 = vsub.f32 %v709, %v741
        %v774 = vsub.f32 %v710, %v742
        %v775 = vsub.f32 %v711, %v743
        %v776 = vsub.f32 %v712, %v744
        %v777 = vsub.f32 %v713, %v745
        %v778 = vsub.f32 %v714, %v746
        %v779 = vsub.f32 %v715, %v747
        %v780 = vsub.f32 %v716, %v748
        %v781 = vsub.f32 %v717, %v749
        %v782 = vsub.f32 %v718, %v750
        %v783 = vsub.f32 %v719, %v751
        %v784 = vsub.f32 %v720, %v752
        %v785 = vsub.f32 %v721, %v753
        %v786 = vsub.f32 %v722, %v754
        %v787 = vsub.f32 %v723, %v755
        %v788 = vsub.f32 %v724, %v756
        %v789 = vsub.f32 %v725, %v757
        %v790 = vsub.f32 %v726, %v758
        %v791 = vsub.f32 %v727, %v759
        %v792 = vsub.f32 %v728, %v760
        %v793 = vsub.f32 %v729, %v761
        %v794 = vsub.f32 %v730, %v762
        %v795 = vsub.f32 %v731, %v763
        %v796 = vsub.f32 %v732, %v764
        %v797 = vsub.f32 %v733, %v765
        %v798 = vsub.f32 %v734, %v766
        %v799 = vsub.f32 %v735, %v767
        %v800 = vsub.f32 %v736, %v768
        %v801 = vmax.f32 %v769, 0.0
        %v802 = vmax.f32 %v770, 0.0
        %v803 = vmax.f32 %v771, 0.0
        %v804 = vmax.f32 %v772, 0.0
        %v805 = vmax.f32 %v773, 0.0
        %v806 = vmax.f32 %v774, 0.0
        %v807 = vmax.f32 %v775, 0.0
        %v808 = vmax.f32 %v776, 0.0
        %v809 = vmax.f32 %v777, 0.0
        %v810 = vmax.f32 %v778, 0.0
        %v811 = vmax.f32 %v779, 0.0
        %v812 = vmax.f32 %v780, 0.0
        %v813 = vmax.f32 %v781, 0.0
        %v814 = vmax.f32 %v782, 0.0
        %v815 = vmax.f32 %v783, 0.0
        %v816 = vmax.f32 %v784, 0.0
        %v817 = vmax.f32 %v785, 0.0
        %v818 = vmax.f32 %v786, 0.0
        %v819 = vmax.f32 %v787, 0.0
        %v820 = vmax.f32 %v788, 0.0
        %v821 = vmax.f32 %v789, 0.0
        %v822 = vmax.f32 %v790, 0.0
        %v823 = vmax.f32 %v791, 0.0
        %v824 = vmax.f32 %v792, 0.0
        %v825 = vmax.f32 %v793, 0.0
        %v826 = vmax.f32 %v794, 0.0
        %v827 = vmax.f32 %v795, 0.0
        %v828 = vmax.f32 %v796, 0.0
        %v829 = vmax.f32 %v797, 0.0
        %v830 = vmax.f32 %v798, 0.0
        %v831 = vmax.f32 %v799, 0.0
        %v832 = vmax.f32 %v800, 0.0
        %v833 = vmul.f32 %v801, -0.5
        %v834 = vmul.f32 %v802, -0.5
        %v835 = vmul.f32 %v803, -0.5
        %v836 = vmul.f32 %v804, -0.5
        %v837 = vmul.f32 %v805, -0.5
        %v838 = vmul.f32 %v806, -0.5
        %v839 = vmul.f32 %v807, -0.5
        %v840 = vmul.f32 %v808, -0.5
        %v841 = vmul.f32 %v809, -0.5
        %v842 = vmul.f32 %v810, -0.5
        %v843 = vmul.f32 %v811, -0.5
        %v844 = vmul.f32 %v812, -0.5
        %v845 = vmul.f32 %v813, -0.5
        %v846 = vmul.f32 %v814, -0.5
        %v847 = vmul.f32 %v815, -0.5
        %v848 = vmul.f32 %v816, -0.5
        %v849 = vmul.f32 %v817, -0.5
        %v850 = vmul.f32 %v818, -0.5
        %v851 = vmul.f32 %v819, -0.5
        %v852 = vmul.f32 %v820, -0.5
        %v853 = vmul.f32 %v821, -0.5
        %v854 = vmul.f32 %v822, -0.5
        %v855 = vmul.f32 %v823, -0.5
        %v856 = vmul.f32 %v824, -0.5
        %v857 = vmul.f32 %v825, -0.5
        %v858 = vmul.f32 %v826, -0.5
        %v859 = vmul.f32 %v827, -0.5
        %v860 = vmul.f32 %v828, -0.5
        %v861 = vmul.f32 %v829, -0.5
        %v862 = vmul.f32 %v830, -0.5
        %v863 = vmul.f32 %v831, -0.5
        %v864 = vmul.f32 %v832, -0.5
        %v865 = vmul.f32 %v833, 1.442695
        %v866 = vpow.pop %v865
        %v867 = vmul.f32 %v834, 1.442695
        %v868 = vpow.pop %v867
        %v869 = vmul.f32 %v835, 1.442695
        %v870 = vpow.pop %v869
        %v871 = vmul.f32 %v836, 1.442695
        %v872 = vpow.pop %v871
        %v873 = vmul.f32 %v837, 1.442695
        %v874 = vpow.pop %v873
        %v875 = vmul.f32 %v838, 1.442695
        %v876 = vpow.pop %v875
        %v877 = vmul.f32 %v839, 1.442695
        %v878 = vpow.pop %v877
        %v879 = vmul.f32 %v840, 1.442695
        %v880 = vpow.pop %v879
        %v881 = vmul.f32 %v841, 1.442695
        %v882 = vpow.pop %v881
        %v883 = vmul.f32 %v842, 1.442695
        %v884 = vpow.pop %v883
        %v885 = vmul.f32 %v843, 1.442695
        %v886 = vpow.pop %v885
        %v887 = vmul.f32 %v844, 1.442695
        %v888 = vpow.pop %v887
        %v889 = vmul.f32 %v845, 1.442695
        %v890 = vpow.pop %v889
        %v891 = vmul.f32 %v846, 1.442695
        %v892 = vpow.pop %v891
        %v893 = vmul.f32 %v847, 1.442695
        %v894 = vpow.pop %v893
        %v895 = vmul.f32 %v848, 1.442695
        %v896 = vpow.pop %v895
        %v897 = vmul.f32 %v849, 1.442695
        %v898 = vpow.pop %v897
        %v899 = vmul.f32 %v850, 1.442695
        %v900 = vpow.pop %v899
        %v901 = vmul.f32 %v851, 1.442695
        %v902 = vpow.pop %v901
        %v903 = vmul.f32 %v852, 1.442695
        %v904 = vpow.pop %v903
        %v905 = vmul.f32 %v853, 1.442695
        %v906 = vpow.pop %v905
        %v907 = vmul.f32 %v854, 1.442695
        %v908 = vpow.pop %v907
        %v909 = vmul.f32 %v855, 1.442695
        %v910 = vpow.pop %v909
        %v911 = vmul.f32 %v856, 1.442695
        %v912 = vpow.pop %v911
        %v913 = vmul.f32 %v857, 1.442695
        %v914 = vpow.pop %v913
        %v915 = vmul.f32 %v858, 1.442695
        %v916 = vpow.pop %v915
        %v917 = vmul.f32 %v859, 1.442695
        %v918 = vpow.pop %v917
        %v919 = vmul.f32 %v860, 1.442695
        %v920 = vpow.pop %v919
        %v921 = vmul.f32 %v861, 1.442695
        %v922 = vpow.pop %v921
        %v923 = vmul.f32 %v862, 1.442695
        %v924 = vpow.pop %v923
        %v925 = vmul.f32 %v863, 1.442695
        %v926 = vpow.pop %v925
        %v927 = vmul.f32 %v864, 1.442695
        %v928 = vpow.pop %v927
        %v929 = vadd.f32 %v866, %v868
        %930 = vadd.xlane.f32.xlu0 %v929
        %v931 = vpop.xlane.xlu0 %930
        %v932 = vadd.f32 %v870, %v872
        %933 = vadd.xlane.f32.xlu0 %v932
        %v934 = vpop.xlane.xlu0 %933
        %v935 = vadd.f32 %v874, %v876
        %936 = vadd.xlane.f32.xlu0 %v935
        %v937 = vpop.xlane.xlu0 %936
        %v938 = vadd.f32 %v878, %v880
        %939 = vadd.xlane.f32.xlu0 %v938
        %v940 = vpop.xlane.xlu0 %939
        %v941 = vadd.f32 %v882, %v884
        %942 = vadd.xlane.f32.xlu0 %v941
        %v943 = vpop.xlane.xlu0 %942
        %v944 = vadd.f32 %v886, %v888
        %945 = vadd.xlane.f32.xlu0 %v944
        %v946 = vpop.xlane.xlu0 %945
        %v947 = vadd.f32 %v890, %v892
        %948 = vadd.xlane.f32.xlu0 %v947
        %v949 = vpop.xlane.xlu0 %948
        %v950 = vadd.f32 %v894, %v896
        %951 = vadd.xlane.f32.xlu0 %v950
        %v952 = vpop.xlane.xlu0 %951
        %v953 = vadd.f32 %v898, %v900
        %954 = vadd.xlane.f32.xlu0 %v953
        %v955 = vpop.xlane.xlu0 %954
        %v956 = vadd.f32 %v902, %v904
        %957 = vadd.xlane.f32.xlu0 %v956
        %v958 = vpop.xlane.xlu0 %957
        %v959 = vadd.f32 %v906, %v908
        %960 = vadd.xlane.f32.xlu0 %v959
        %v961 = vpop.xlane.xlu0 %960
        %v962 = vadd.f32 %v910, %v912
        %963 = vadd.xlane.f32.xlu0 %v962
        %v964 = vpop.xlane.xlu0 %963
        %v965 = vadd.f32 %v914, %v916
        %966 = vadd.xlane.f32.xlu0 %v965
        %v967 = vpop.xlane.xlu0 %966
        %v968 = vadd.f32 %v918, %v920
        %969 = vadd.xlane.f32.xlu0 %v968
        %v970 = vpop.xlane.xlu0 %969
        %v971 = vadd.f32 %v922, %v924
        %972 = vadd.xlane.f32.xlu0 %v971
        %v973 = vpop.xlane.xlu0 %972
        %v974 = vadd.f32 %v926, %v928
        %975 = vadd.xlane.f32.xlu0 %v974
        %v976 = vpop.xlane.xlu0 %975
        %v977 = vadd.f32 %v931, 1e-08
        %v978 = vadd.f32 %v934, 1e-08
        %v979 = vadd.f32 %v937, 1e-08
        %v980 = vadd.f32 %v940, 1e-08
        %v981 = vadd.f32 %v943, 1e-08
        %v982 = vadd.f32 %v946, 1e-08
        %v983 = vadd.f32 %v949, 1e-08
        %v984 = vadd.f32 %v952, 1e-08
        %v985 = vadd.f32 %v955, 1e-08
        %v986 = vadd.f32 %v958, 1e-08
        %v987 = vadd.f32 %v961, 1e-08
        %v988 = vadd.f32 %v964, 1e-08
        %v989 = vadd.f32 %v967, 1e-08
        %v990 = vadd.f32 %v970, 1e-08
        %v991 = vadd.f32 %v973, 1e-08
        %v992 = vadd.f32 %v976, 1e-08
        %v993 = vrcp.pop %v977
        %v994 = vrcp.pop %v978
        %v995 = vrcp.pop %v979
        %v996 = vrcp.pop %v980
        %v997 = vrcp.pop %v981
        %v998 = vrcp.pop %v982
        %v999 = vrcp.pop %v983
        %v1000 = vrcp.pop %v984
        %v1001 = vrcp.pop %v985
        %v1002 = vrcp.pop %v986
        %v1003 = vrcp.pop %v987
        %v1004 = vrcp.pop %v988
        %v1005 = vrcp.pop %v989
        %v1006 = vrcp.pop %v990
        %v1007 = vrcp.pop %v991
        %v1008 = vrcp.pop %v992
        %v1009 = vmul.f32 %v866, %v993
        %v1010 = vmul.f32 %v868, %v993
        %v1011 = vmul.f32 %v870, %v994
        %v1012 = vmul.f32 %v872, %v994
        %v1013 = vmul.f32 %v874, %v995
        %v1014 = vmul.f32 %v876, %v995
        %v1015 = vmul.f32 %v878, %v996
        %v1016 = vmul.f32 %v880, %v996
        %v1017 = vmul.f32 %v882, %v997
        %v1018 = vmul.f32 %v884, %v997
        %v1019 = vmul.f32 %v886, %v998
        %v1020 = vmul.f32 %v888, %v998
        %v1021 = vmul.f32 %v890, %v999
        %v1022 = vmul.f32 %v892, %v999
        %v1023 = vmul.f32 %v894, %v1000
        %v1024 = vmul.f32 %v896, %v1000
        %v1025 = vmul.f32 %v898, %v1001
        %v1026 = vmul.f32 %v900, %v1001
        %v1027 = vmul.f32 %v902, %v1002
        %v1028 = vmul.f32 %v904, %v1002
        %v1029 = vmul.f32 %v906, %v1003
        %v1030 = vmul.f32 %v908, %v1003
        %v1031 = vmul.f32 %v910, %v1004
        %v1032 = vmul.f32 %v912, %v1004
        %v1033 = vmul.f32 %v914, %v1005
        %v1034 = vmul.f32 %v916, %v1005
        %v1035 = vmul.f32 %v918, %v1006
        %v1036 = vmul.f32 %v920, %v1006
        %v1037 = vmul.f32 %v922, %v1007
        %v1038 = vmul.f32 %v924, %v1007
        %v1039 = vmul.f32 %v926, %v1008
        %v1040 = vmul.f32 %v928, %v1008
        %v1041 = vld [vmem:[%s272] sm:$0xff]
        %v1042 = vld [vmem:[%s272 + $0x8] sm:$0xff]
        %v1043 = vld [vmem:[%s272 + $0x10] sm:$0xff]
        %v1044 = vld [vmem:[%s272 + $0x18] sm:$0xff]
        %v1045 = vld [vmem:[%s272 + $0x20] sm:$0xff]
        %v1046 = vld [vmem:[%s272 + $0x28] sm:$0xff]
        %v1047 = vld [vmem:[%s272 + $0x30] sm:$0xff]
        %v1048 = vld [vmem:[%s272 + $0x38] sm:$0xff]
        %v1049 = vld [vmem:[%s272 + $0x40] sm:$0xff]
        %v1050 = vld [vmem:[%s272 + $0x48] sm:$0xff]
        %v1051 = vld [vmem:[%s272 + $0x50] sm:$0xff]
        %v1052 = vld [vmem:[%s272 + $0x58] sm:$0xff]
        %v1053 = vld [vmem:[%s272 + $0x60] sm:$0xff]
        %v1054 = vld [vmem:[%s272 + $0x68] sm:$0xff]
        %v1055 = vld [vmem:[%s272 + $0x70] sm:$0xff]
        %v1056 = vld [vmem:[%s272 + $0x78] sm:$0xff]
        %v1057 = vld [vmem:[%s4] sm:$0xff]
        %v1058 = vld [vmem:[%s4 + $0x8] sm:$0xff]
        %v1059 = vld [vmem:[%s4 + $0x10] sm:$0xff]
        %v1060 = vld [vmem:[%s4 + $0x18] sm:$0xff]
        %v1061 = vld [vmem:[%s4 + $0x20] sm:$0xff]
        %v1062 = vld [vmem:[%s4 + $0x28] sm:$0xff]
        %v1063 = vld [vmem:[%s4 + $0x30] sm:$0xff]
        %v1064 = vld [vmem:[%s4 + $0x38] sm:$0xff]
        %v1065 = vld [vmem:[%s4 + $0x40] sm:$0xff]
        %v1066 = vld [vmem:[%s4 + $0x48] sm:$0xff]
        %v1067 = vld [vmem:[%s4 + $0x50] sm:$0xff]
        %v1068 = vld [vmem:[%s4 + $0x58] sm:$0xff]
        %v1069 = vld [vmem:[%s4 + $0x60] sm:$0xff]
        %v1070 = vld [vmem:[%s4 + $0x68] sm:$0xff]
        %v1071 = vld [vmem:[%s4 + $0x70] sm:$0xff]
        %v1072 = vld [vmem:[%s4 + $0x78] sm:$0xff]
        %v1073 = vld [vmem:[%s4 + $0x80] sm:$0xff]
        %v1074 = vld [vmem:[%s4 + $0x88] sm:$0xff]
        %v1075 = vld [vmem:[%s4 + $0x90] sm:$0xff]
        %v1076 = vld [vmem:[%s4 + $0x98] sm:$0xff]
        %v1077 = vld [vmem:[%s4 + $0xa0] sm:$0xff]
        %v1078 = vld [vmem:[%s4 + $0xa8] sm:$0xff]
        %v1079 = vld [vmem:[%s4 + $0xb0] sm:$0xff]
        %v1080 = vld [vmem:[%s4 + $0xb8] sm:$0xff]
        %v1081 = vld [vmem:[%s4 + $0xc0] sm:$0xff]
        %v1082 = vld [vmem:[%s4 + $0xc8] sm:$0xff]
        %v1083 = vld [vmem:[%s4 + $0xd0] sm:$0xff]
        %v1084 = vld [vmem:[%s4 + $0xd8] sm:$0xff]
        %v1085 = vld [vmem:[%s4 + $0xe0] sm:$0xff]
        %v1086 = vld [vmem:[%s4 + $0xe8] sm:$0xff]
        %v1087 = vld [vmem:[%s4 + $0xf0] sm:$0xff]
        %v1088 = vld [vmem:[%s4 + $0xf8] sm:$0xff]
        %v1089 = vld [vmem:[%s5] sm:$0x3]
        %v1090 = vmul.f32 %v1041, %v1041
        %v1091 = vmul.f32 %v1042, %v1042
        %v1092 = vmul.f32 %v1043, %v1043
        %v1093 = vmul.f32 %v1044, %v1044
        %v1094 = vmul.f32 %v1045, %v1045
        %v1095 = vmul.f32 %v1046, %v1046
        %v1096 = vmul.f32 %v1047, %v1047
        %v1097 = vmul.f32 %v1048, %v1048
        %v1098 = vmul.f32 %v1049, %v1049
        %v1099 = vmul.f32 %v1050, %v1050
        %v1100 = vmul.f32 %v1051, %v1051
        %v1101 = vmul.f32 %v1052, %v1052
        %v1102 = vmul.f32 %v1053, %v1053
        %v1103 = vmul.f32 %v1054, %v1054
        %v1104 = vmul.f32 %v1055, %v1055
        %v1105 = vmul.f32 %v1056, %v1056
        %v1106 = vsel %vm340, %v1090, 0.0
        %1107 = vadd.xlane.f32.xlu0 %v1106
        %v1108 = vpop.xlane.xlu0 %1107
        %v1109 = vsel %vm340, %v1091, 0.0
        %1110 = vadd.xlane.f32.xlu0 %v1109
        %v1111 = vpop.xlane.xlu0 %1110
        %v1112 = vsel %vm340, %v1092, 0.0
        %1113 = vadd.xlane.f32.xlu0 %v1112
        %v1114 = vpop.xlane.xlu0 %1113
        %v1115 = vsel %vm340, %v1093, 0.0
        %1116 = vadd.xlane.f32.xlu0 %v1115
        %v1117 = vpop.xlane.xlu0 %1116
        %v1118 = vsel %vm340, %v1094, 0.0
        %1119 = vadd.xlane.f32.xlu0 %v1118
        %v1120 = vpop.xlane.xlu0 %1119
        %v1121 = vsel %vm340, %v1095, 0.0
        %1122 = vadd.xlane.f32.xlu0 %v1121
        %v1123 = vpop.xlane.xlu0 %1122
        %v1124 = vsel %vm340, %v1096, 0.0
        %1125 = vadd.xlane.f32.xlu0 %v1124
        %v1126 = vpop.xlane.xlu0 %1125
        %v1127 = vsel %vm340, %v1097, 0.0
        %1128 = vadd.xlane.f32.xlu0 %v1127
        %v1129 = vpop.xlane.xlu0 %1128
        %v1130 = vsel %vm340, %v1098, 0.0
        %1131 = vadd.xlane.f32.xlu0 %v1130
        %v1132 = vpop.xlane.xlu0 %1131
        %v1133 = vsel %vm340, %v1099, 0.0
        %1134 = vadd.xlane.f32.xlu0 %v1133
        %v1135 = vpop.xlane.xlu0 %1134
        %v1136 = vsel %vm340, %v1100, 0.0
        %1137 = vadd.xlane.f32.xlu0 %v1136
        %v1138 = vpop.xlane.xlu0 %1137
        %v1139 = vsel %vm340, %v1101, 0.0
        %1140 = vadd.xlane.f32.xlu0 %v1139
        %v1141 = vpop.xlane.xlu0 %1140
        %v1142 = vsel %vm340, %v1102, 0.0
        %1143 = vadd.xlane.f32.xlu0 %v1142
        %v1144 = vpop.xlane.xlu0 %1143
        %v1145 = vsel %vm340, %v1103, 0.0
        %1146 = vadd.xlane.f32.xlu0 %v1145
        %v1147 = vpop.xlane.xlu0 %1146
        %v1148 = vsel %vm340, %v1104, 0.0
        %1149 = vadd.xlane.f32.xlu0 %v1148
        %v1150 = vpop.xlane.xlu0 %1149
        %v1151 = vsel %vm340, %v1105, 0.0
        %1152 = vadd.xlane.f32.xlu0 %v1151
        %v1153 = vpop.xlane.xlu0 %1152
        %v1155 = vsel %vm340, %v1041, 0
        %v1158 = vsel %vm340, %v1042, 0
        %v1161 = vsel %vm340, %v1043, 0
        %v1164 = vsel %vm340, %v1044, 0
        %v1167 = vsel %vm340, %v1045, 0
        %v1170 = vsel %vm340, %v1046, 0
        %v1173 = vsel %vm340, %v1047, 0
        %v1176 = vsel %vm340, %v1048, 0
        %v1179 = vsel %vm340, %v1049, 0
        %v1182 = vsel %vm340, %v1050, 0
        %v1185 = vsel %vm340, %v1051, 0
        %v1188 = vsel %vm340, %v1052, 0
        %v1191 = vsel %vm340, %v1053, 0
        %v1194 = vsel %vm340, %v1054, 0
        %v1197 = vsel %vm340, %v1055, 0
        %v1200 = vsel %vm340, %v1056, 0
        %v1203 = vsel %vm340, %v1057, 0
        %v1206 = vsel %vm340, %v1058, 0
        %v1209 = vsel %vm340, %v1059, 0
        %v1212 = vsel %vm340, %v1060, 0
        %v1215 = vsel %vm340, %v1061, 0
        %v1218 = vsel %vm340, %v1062, 0
        %v1221 = vsel %vm340, %v1063, 0
        %v1224 = vsel %vm340, %v1064, 0
        %v1227 = vsel %vm340, %v1065, 0
        %v1230 = vsel %vm340, %v1066, 0
        %v1233 = vsel %vm340, %v1067, 0
        %v1236 = vsel %vm340, %v1068, 0
        %v1239 = vsel %vm340, %v1069, 0
        %v1242 = vsel %vm340, %v1070, 0
        %v1245 = vsel %vm340, %v1071, 0
        %v1248 = vsel %vm340, %v1072, 0
        %v1251 = vsel %vm340, %v1073, 0
        %v1254 = vsel %vm340, %v1074, 0
        %v1257 = vsel %vm340, %v1075, 0
        %v1260 = vsel %vm340, %v1076, 0
        %v1263 = vsel %vm340, %v1077, 0
        %v1266 = vsel %vm340, %v1078, 0
        %v1269 = vsel %vm340, %v1079, 0
        %v1272 = vsel %vm340, %v1080, 0
        %v1275 = vsel %vm340, %v1081, 0
        %v1278 = vsel %vm340, %v1082, 0
        %v1281 = vsel %vm340, %v1083, 0
        %v1284 = vsel %vm340, %v1084, 0
        %v1287 = vsel %vm340, %v1085, 0
        %v1290 = vsel %vm340, %v1086, 0
        %v1293 = vsel %vm340, %v1087, 0
        %v1296 = vsel %vm340, %v1088, 0
        %1298 = vmatprep.subr.mxu0 0.0
        %1299 = vmatpush1.xpose.msra.mxu0 %v1203
        %1300 = vmatprep.subr.mxu0 0.0
        %1301 = vmatpush1.xpose.msra.mxu0 %v1206
        %1302 = vmatprep.subr.mxu0 0.0
        %1303 = vmatpush1.xpose.msra.mxu0 %v1209
        %1304 = vmatprep.subr.mxu0 0.0
        %1305 = vmatpush1.xpose.msra.mxu0 %v1212
        %1306 = vmatprep.subr.mxu0 0.0
        %1307 = vmatpush1.xpose.msra.mxu0 %v1215
        %1308 = vmatprep.subr.mxu0 0.0
        %1309 = vmatpush1.xpose.msra.mxu0 %v1218
        %1310 = vmatprep.subr.mxu0 0.0
        %1311 = vmatpush1.xpose.msra.mxu0 %v1221
        %1312 = vmatprep.subr.mxu0 0.0
        %1313 = vmatpush1.xpose.msra.mxu0 %v1224
        %1314 = vmatprep.subr.mxu0 0.0
        %1315 = vmatpush1.xpose.msra.mxu0 %v1227
        %1316 = vmatprep.subr.mxu0 0.0
        %1317 = vmatpush1.xpose.msra.mxu0 %v1230
        %1318 = vmatprep.subr.mxu0 0.0
        %1319 = vmatpush1.xpose.msra.mxu0 %v1233
        %1320 = vmatprep.subr.mxu0 0.0
        %1321 = vmatpush1.xpose.msra.mxu0 %v1236
        %1322 = vmatprep.subr.mxu0 0.0
        %1323 = vmatpush1.xpose.msra.mxu0 %v1239
        %1324 = vmatprep.subr.mxu0 0.0
        %1325 = vmatpush1.xpose.msra.mxu0 %v1242
        %1326 = vmatprep.subr.mxu0 0.0
        %1327 = vmatpush1.xpose.msra.mxu0 %v1245
        %1328 = vmatprep.subr.mxu0 0.0
        %1329 = vmatpush1.xpose.msra.mxu0 %v1248
        %1330 = vmatprep.subr.mxu0 0.0
        %1331 = vmatpush1.xpose.msra.mxu0 %v1251
        %1332 = vmatprep.subr.mxu0 0.0
        %1333 = vmatpush1.xpose.msra.mxu0 %v1254
        %1334 = vmatprep.subr.mxu0 0.0
        %1335 = vmatpush1.xpose.msra.mxu0 %v1257
        %1336 = vmatprep.subr.mxu0 0.0
        %1337 = vmatpush1.xpose.msra.mxu0 %v1260
        %1338 = vmatprep.subr.mxu0 0.0
        %1339 = vmatpush1.xpose.msra.mxu0 %v1263
        %1340 = vmatprep.subr.mxu0 0.0
        %1341 = vmatpush1.xpose.msra.mxu0 %v1266
        %1342 = vmatprep.subr.mxu0 0.0
        %1343 = vmatpush1.xpose.msra.mxu0 %v1269
        %1344 = vmatprep.subr.mxu0 0.0
        %1345 = vmatpush1.xpose.msra.mxu0 %v1272
        %1346 = vmatprep.subr.mxu0 0.0
        %1347 = vmatpush1.xpose.msra.mxu0 %v1275
        %1348 = vmatprep.subr.mxu0 0.0
        %1349 = vmatpush1.xpose.msra.mxu0 %v1278
        %1350 = vmatprep.subr.mxu0 0.0
        %1351 = vmatpush1.xpose.msra.mxu0 %v1281
        %1352 = vmatprep.subr.mxu0 0.0
        %1353 = vmatpush1.xpose.msra.mxu0 %v1284
        %1354 = vmatprep.subr.mxu0 0.0
        %1355 = vmatpush1.xpose.msra.mxu0 %v1287
        %1356 = vmatprep.subr.mxu0 0.0
        %1357 = vmatpush1.xpose.msra.mxu0 %v1290
        %1358 = vmatprep.subr.mxu0 0.0
        %1359 = vmatpush1.xpose.msra.mxu0 %v1293
        %1360 = vmatprep.subr.mxu0 0.0
        %1361 = vmatpush1.xpose.msra.mxu0 %v1296
        %1362 = vmatprep.mubr.f32.mxu0 0.0
        %1363 = vmatmul.mubr.f32.gmra.mrb[0].mxu0 %v1155
        %v1364 = vpop.f32.mrb[0].mxu0
        %v1365 = vadd.f32 0.0, %v1364
        %v1366 = vpop.f32.mrb[0].mxu0
        %v1367 = vadd.f32 0.0, %v1366
        %1368 = vmatprep.mubr.f32.mxu0 0.0
        %1369 = vmatmul.mubr.f32.gmra.mrb[0].mxu0 %v1158
        %v1370 = vpop.f32.mrb[0].mxu0
        %v1371 = vadd.f32 0.0, %v1370
        %v1372 = vpop.f32.mrb[0].mxu0
        %v1373 = vadd.f32 0.0, %v1372
        %1374 = vmatprep.mubr.f32.mxu0 0.0
        %1375 = vmatmul.mubr.f32.gmra.mrb[0].mxu0 %v1161
        %v1376 = vpop.f32.mrb[0].mxu0
        %v1377 = vadd.f32 0.0, %v1376
        %v1378 = vpop.f32.mrb[0].mxu0
        %v1379 = vadd.f32 0.0, %v1378
        %1380 = vmatprep.mubr.f32.mxu0 0.0
        %1381 = vmatmul.mubr.f32.gmra.mrb[0].mxu0 %v1164
        %v1382 = vpop.f32.mrb[0].mxu0
        %v1383 = vadd.f32 0.0, %v1382
        %v1384 = vpop.f32.mrb[0].mxu0
        %v1385 = vadd.f32 0.0, %v1384
        %1386 = vmatprep.mubr.f32.mxu0 0.0
        %1387 = vmatmul.mubr.f32.gmra.mrb[0].mxu0 %v1167
        %v1388 = vpop.f32.mrb[0].mxu0
        %v1389 = vadd.f32 0.0, %v1388
        %v1390 = vpop.f32.mrb[0].mxu0
        %v1391 = vadd.f32 0.0, %v1390
        %1392 = vmatprep.mubr.f32.mxu0 0.0
        %1393 = vmatmul.mubr.f32.gmra.mrb[0].mxu0 %v1170
        %v1394 = vpop.f32.mrb[0].mxu0
        %v1395 = vadd.f32 0.0, %v1394
        %v1396 = vpop.f32.mrb[0].mxu0
        %v1397 = vadd.f32 0.0, %v1396
        %1398 = vmatprep.mubr.f32.mxu0 0.0
        %1399 = vmatmul.mubr.f32.gmra.mrb[0].mxu0 %v1173
        %v1400 = vpop.f32.mrb[0].mxu0
        %v1401 = vadd.f32 0.0, %v1400
        %v1402 = vpop.f32.mrb[0].mxu0
        %v1403 = vadd.f32 0.0, %v1402
        %1404 = vmatprep.mubr.f32.mxu0 0.0
        %1405 = vmatmul.mubr.f32.gmra.mrb[0].mxu0 %v1176
        %v1406 = vpop.f32.mrb[0].mxu0
        %v1407 = vadd.f32 0.0, %v1406
        %v1408 = vpop.f32.mrb[0].mxu0
        %v1409 = vadd.f32 0.0, %v1408
        %1410 = vmatprep.mubr.f32.mxu0 0.0
        %1411 = vmatmul.mubr.f32.gmra.mrb[0].mxu0 %v1179
        %v1412 = vpop.f32.mrb[0].mxu0
        %v1413 = vadd.f32 0.0, %v1412
        %v1414 = vpop.f32.mrb[0].mxu0
        %v1415 = vadd.f32 0.0, %v1414
        %1416 = vmatprep.mubr.f32.mxu0 0.0
        %1417 = vmatmul.mubr.f32.gmra.mrb[0].mxu0 %v1182
        %v1418 = vpop.f32.mrb[0].mxu0
        %v1419 = vadd.f32 0.0, %v1418
        %v1420 = vpop.f32.mrb[0].mxu0
        %v1421 = vadd.f32 0.0, %v1420
        %1422 = vmatprep.mubr.f32.mxu0 0.0
        %1423 = vmatmul.mubr.f32.gmra.mrb[0].mxu0 %v1185
        %v1424 = vpop.f32.mrb[0].mxu0
        %v1425 = vadd.f32 0.0, %v1424
        %v1426 = vpop.f32.mrb[0].mxu0
        %v1427 = vadd.f32 0.0, %v1426
        %1428 = vmatprep.mubr.f32.mxu0 0.0
        %1429 = vmatmul.mubr.f32.gmra.mrb[0].mxu0 %v1188
        %v1430 = vpop.f32.mrb[0].mxu0
        %v1431 = vadd.f32 0.0, %v1430
        %v1432 = vpop.f32.mrb[0].mxu0
        %v1433 = vadd.f32 0.0, %v1432
        %1434 = vmatprep.mubr.f32.mxu0 0.0
        %1435 = vmatmul.mubr.f32.gmra.mrb[0].mxu0 %v1191
        %v1436 = vpop.f32.mrb[0].mxu0
        %v1437 = vadd.f32 0.0, %v1436
        %v1438 = vpop.f32.mrb[0].mxu0
        %v1439 = vadd.f32 0.0, %v1438
        %1440 = vmatprep.mubr.f32.mxu0 0.0
        %1441 = vmatmul.mubr.f32.gmra.mrb[0].mxu0 %v1194
        %v1442 = vpop.f32.mrb[0].mxu0
        %v1443 = vadd.f32 0.0, %v1442
        %v1444 = vpop.f32.mrb[0].mxu0
        %v1445 = vadd.f32 0.0, %v1444
        %1446 = vmatprep.mubr.f32.mxu0 0.0
        %1447 = vmatmul.mubr.f32.gmra.mrb[0].mxu0 %v1197
        %v1448 = vpop.f32.mrb[0].mxu0
        %v1449 = vadd.f32 0.0, %v1448
        %v1450 = vpop.f32.mrb[0].mxu0
        %v1451 = vadd.f32 0.0, %v1450
        %1452 = vmatprep.mubr.f32.mxu0 0.0
        %1453 = vmatmul.mubr.f32.gmra.mrb[0].mxu0 %v1200
        %v1454 = vpop.f32.mrb[0].mxu0
        %v1455 = vadd.f32 0.0, %v1454
        %v1456 = vpop.f32.mrb[0].mxu0
        %v1457 = vadd.f32 0.0, %v1456
        %1458 = vdwg.mxu0
        %v1460 = vlaneseq
        %v1461 = vshrl.u32 %v1460, 7
        %v1462 = vsub.s32 0, %v1461
        %v1463 = vrot.slane %v1089, %v1462
        %v1464 = vlaneseq
        %v1465 = vshrl.u32 %v1464, 7
        %v1466 = vsub.s32 1, %v1465
        %v1467 = vrot.slane %v1089, %v1466
        %v1470 = vadd.f32 %v1108, %v1463
        %v1471 = vadd.f32 %v1108, %v1467
        %v1472 = vadd.f32 %v1111, %v1463
        %v1473 = vadd.f32 %v1111, %v1467
        %v1474 = vadd.f32 %v1114, %v1463
        %v1475 = vadd.f32 %v1114, %v1467
        %v1476 = vadd.f32 %v1117, %v1463
        %v1477 = vadd.f32 %v1117, %v1467
        %v1478 = vadd.f32 %v1120, %v1463
        %v1479 = vadd.f32 %v1120, %v1467
        %v1480 = vadd.f32 %v1123, %v1463
        %v1481 = vadd.f32 %v1123, %v1467
        %v1482 = vadd.f32 %v1126, %v1463
        %v1483 = vadd.f32 %v1126, %v1467
        %v1484 = vadd.f32 %v1129, %v1463
        %v1485 = vadd.f32 %v1129, %v1467
        %v1486 = vadd.f32 %v1132, %v1463
        %v1487 = vadd.f32 %v1132, %v1467
        %v1488 = vadd.f32 %v1135, %v1463
        %v1489 = vadd.f32 %v1135, %v1467
        %v1490 = vadd.f32 %v1138, %v1463
        %v1491 = vadd.f32 %v1138, %v1467
        %v1492 = vadd.f32 %v1141, %v1463
        %v1493 = vadd.f32 %v1141, %v1467
        %v1494 = vadd.f32 %v1144, %v1463
        %v1495 = vadd.f32 %v1144, %v1467
        %v1496 = vadd.f32 %v1147, %v1463
        %v1497 = vadd.f32 %v1147, %v1467
        %v1498 = vadd.f32 %v1150, %v1463
        %v1499 = vadd.f32 %v1150, %v1467
        %v1500 = vadd.f32 %v1153, %v1463
        %v1501 = vadd.f32 %v1153, %v1467
        %v1502 = vmul.f32 %v1365, 2.0
        %v1503 = vmul.f32 %v1367, 2.0
        %v1504 = vmul.f32 %v1371, 2.0
        %v1505 = vmul.f32 %v1373, 2.0
        %v1506 = vmul.f32 %v1377, 2.0
        %v1507 = vmul.f32 %v1379, 2.0
        %v1508 = vmul.f32 %v1383, 2.0
        %v1509 = vmul.f32 %v1385, 2.0
        %v1510 = vmul.f32 %v1389, 2.0
        %v1511 = vmul.f32 %v1391, 2.0
        %v1512 = vmul.f32 %v1395, 2.0
        %v1513 = vmul.f32 %v1397, 2.0
        %v1514 = vmul.f32 %v1401, 2.0
        %v1515 = vmul.f32 %v1403, 2.0
        %v1516 = vmul.f32 %v1407, 2.0
        %v1517 = vmul.f32 %v1409, 2.0
        %v1518 = vmul.f32 %v1413, 2.0
        %v1519 = vmul.f32 %v1415, 2.0
        %v1520 = vmul.f32 %v1419, 2.0
        %v1521 = vmul.f32 %v1421, 2.0
        %v1522 = vmul.f32 %v1425, 2.0
        %v1523 = vmul.f32 %v1427, 2.0
        %v1524 = vmul.f32 %v1431, 2.0
        %v1525 = vmul.f32 %v1433, 2.0
        %v1526 = vmul.f32 %v1437, 2.0
        %v1527 = vmul.f32 %v1439, 2.0
        %v1528 = vmul.f32 %v1443, 2.0
        %v1529 = vmul.f32 %v1445, 2.0
        %v1530 = vmul.f32 %v1449, 2.0
        %v1531 = vmul.f32 %v1451, 2.0
        %v1532 = vmul.f32 %v1455, 2.0
        %v1533 = vmul.f32 %v1457, 2.0
        %v1534 = vsub.f32 %v1470, %v1502
        %v1535 = vsub.f32 %v1471, %v1503
        %v1536 = vsub.f32 %v1472, %v1504
        %v1537 = vsub.f32 %v1473, %v1505
        %v1538 = vsub.f32 %v1474, %v1506
        %v1539 = vsub.f32 %v1475, %v1507
        %v1540 = vsub.f32 %v1476, %v1508
        %v1541 = vsub.f32 %v1477, %v1509
        %v1542 = vsub.f32 %v1478, %v1510
        %v1543 = vsub.f32 %v1479, %v1511
        %v1544 = vsub.f32 %v1480, %v1512
        %v1545 = vsub.f32 %v1481, %v1513
        %v1546 = vsub.f32 %v1482, %v1514
        %v1547 = vsub.f32 %v1483, %v1515
        %v1548 = vsub.f32 %v1484, %v1516
        %v1549 = vsub.f32 %v1485, %v1517
        %v1550 = vsub.f32 %v1486, %v1518
        %v1551 = vsub.f32 %v1487, %v1519
        %v1552 = vsub.f32 %v1488, %v1520
        %v1553 = vsub.f32 %v1489, %v1521
        %v1554 = vsub.f32 %v1490, %v1522
        %v1555 = vsub.f32 %v1491, %v1523
        %v1556 = vsub.f32 %v1492, %v1524
        %v1557 = vsub.f32 %v1493, %v1525
        %v1558 = vsub.f32 %v1494, %v1526
        %v1559 = vsub.f32 %v1495, %v1527
        %v1560 = vsub.f32 %v1496, %v1528
        %v1561 = vsub.f32 %v1497, %v1529
        %v1562 = vsub.f32 %v1498, %v1530
        %v1563 = vsub.f32 %v1499, %v1531
        %v1564 = vsub.f32 %v1500, %v1532
        %v1565 = vsub.f32 %v1501, %v1533
        %v1566 = vmax.f32 %v1534, 0.0
        %v1567 = vmax.f32 %v1535, 0.0
        %v1568 = vmax.f32 %v1536, 0.0
        %v1569 = vmax.f32 %v1537, 0.0
        %v1570 = vmax.f32 %v1538, 0.0
        %v1571 = vmax.f32 %v1539, 0.0
        %v1572 = vmax.f32 %v1540, 0.0
        %v1573 = vmax.f32 %v1541, 0.0
        %v1574 = vmax.f32 %v1542, 0.0
        %v1575 = vmax.f32 %v1543, 0.0
        %v1576 = vmax.f32 %v1544, 0.0
        %v1577 = vmax.f32 %v1545, 0.0
        %v1578 = vmax.f32 %v1546, 0.0
        %v1579 = vmax.f32 %v1547, 0.0
        %v1580 = vmax.f32 %v1548, 0.0
        %v1581 = vmax.f32 %v1549, 0.0
        %v1582 = vmax.f32 %v1550, 0.0
        %v1583 = vmax.f32 %v1551, 0.0
        %v1584 = vmax.f32 %v1552, 0.0
        %v1585 = vmax.f32 %v1553, 0.0
        %v1586 = vmax.f32 %v1554, 0.0
        %v1587 = vmax.f32 %v1555, 0.0
        %v1588 = vmax.f32 %v1556, 0.0
        %v1589 = vmax.f32 %v1557, 0.0
        %v1590 = vmax.f32 %v1558, 0.0
        %v1591 = vmax.f32 %v1559, 0.0
        %v1592 = vmax.f32 %v1560, 0.0
        %v1593 = vmax.f32 %v1561, 0.0
        %v1594 = vmax.f32 %v1562, 0.0
        %v1595 = vmax.f32 %v1563, 0.0
        %v1596 = vmax.f32 %v1564, 0.0
        %v1597 = vmax.f32 %v1565, 0.0
        %v1598 = vmul.f32 %v1566, -0.5
        %v1599 = vmul.f32 %v1567, -0.5
        %v1600 = vmul.f32 %v1568, -0.5
        %v1601 = vmul.f32 %v1569, -0.5
        %v1602 = vmul.f32 %v1570, -0.5
        %v1603 = vmul.f32 %v1571, -0.5
        %v1604 = vmul.f32 %v1572, -0.5
        %v1605 = vmul.f32 %v1573, -0.5
        %v1606 = vmul.f32 %v1574, -0.5
        %v1607 = vmul.f32 %v1575, -0.5
        %v1608 = vmul.f32 %v1576, -0.5
        %v1609 = vmul.f32 %v1577, -0.5
        %v1610 = vmul.f32 %v1578, -0.5
        %v1611 = vmul.f32 %v1579, -0.5
        %v1612 = vmul.f32 %v1580, -0.5
        %v1613 = vmul.f32 %v1581, -0.5
        %v1614 = vmul.f32 %v1582, -0.5
        %v1615 = vmul.f32 %v1583, -0.5
        %v1616 = vmul.f32 %v1584, -0.5
        %v1617 = vmul.f32 %v1585, -0.5
        %v1618 = vmul.f32 %v1586, -0.5
        %v1619 = vmul.f32 %v1587, -0.5
        %v1620 = vmul.f32 %v1588, -0.5
        %v1621 = vmul.f32 %v1589, -0.5
        %v1622 = vmul.f32 %v1590, -0.5
        %v1623 = vmul.f32 %v1591, -0.5
        %v1624 = vmul.f32 %v1592, -0.5
        %v1625 = vmul.f32 %v1593, -0.5
        %v1626 = vmul.f32 %v1594, -0.5
        %v1627 = vmul.f32 %v1595, -0.5
        %v1628 = vmul.f32 %v1596, -0.5
        %v1629 = vmul.f32 %v1597, -0.5
        %v1630 = vmul.f32 %v1598, 1.442695
        %v1631 = vpow.pop %v1630
        %v1632 = vmul.f32 %v1599, 1.442695
        %v1633 = vpow.pop %v1632
        %v1634 = vmul.f32 %v1600, 1.442695
        %v1635 = vpow.pop %v1634
        %v1636 = vmul.f32 %v1601, 1.442695
        %v1637 = vpow.pop %v1636
        %v1638 = vmul.f32 %v1602, 1.442695
        %v1639 = vpow.pop %v1638
        %v1640 = vmul.f32 %v1603, 1.442695
        %v1641 = vpow.pop %v1640
        %v1642 = vmul.f32 %v1604, 1.442695
        %v1643 = vpow.pop %v1642
        %v1644 = vmul.f32 %v1605, 1.442695
        %v1645 = vpow.pop %v1644
        %v1646 = vmul.f32 %v1606, 1.442695
        %v1647 = vpow.pop %v1646
        %v1648 = vmul.f32 %v1607, 1.442695
        %v1649 = vpow.pop %v1648
        %v1650 = vmul.f32 %v1608, 1.442695
        %v1651 = vpow.pop %v1650
        %v1652 = vmul.f32 %v1609, 1.442695
        %v1653 = vpow.pop %v1652
        %v1654 = vmul.f32 %v1610, 1.442695
        %v1655 = vpow.pop %v1654
        %v1656 = vmul.f32 %v1611, 1.442695
        %v1657 = vpow.pop %v1656
        %v1658 = vmul.f32 %v1612, 1.442695
        %v1659 = vpow.pop %v1658
        %v1660 = vmul.f32 %v1613, 1.442695
        %v1661 = vpow.pop %v1660
        %v1662 = vmul.f32 %v1614, 1.442695
        %v1663 = vpow.pop %v1662
        %v1664 = vmul.f32 %v1615, 1.442695
        %v1665 = vpow.pop %v1664
        %v1666 = vmul.f32 %v1616, 1.442695
        %v1667 = vpow.pop %v1666
        %v1668 = vmul.f32 %v1617, 1.442695
        %v1669 = vpow.pop %v1668
        %v1670 = vmul.f32 %v1618, 1.442695
        %v1671 = vpow.pop %v1670
        %v1672 = vmul.f32 %v1619, 1.442695
        %v1673 = vpow.pop %v1672
        %v1674 = vmul.f32 %v1620, 1.442695
        %v1675 = vpow.pop %v1674
        %v1676 = vmul.f32 %v1621, 1.442695
        %v1677 = vpow.pop %v1676
        %v1678 = vmul.f32 %v1622, 1.442695
        %v1679 = vpow.pop %v1678
        %v1680 = vmul.f32 %v1623, 1.442695
        %v1681 = vpow.pop %v1680
        %v1682 = vmul.f32 %v1624, 1.442695
        %v1683 = vpow.pop %v1682
        %v1684 = vmul.f32 %v1625, 1.442695
        %v1685 = vpow.pop %v1684
        %v1686 = vmul.f32 %v1626, 1.442695
        %v1687 = vpow.pop %v1686
        %v1688 = vmul.f32 %v1627, 1.442695
        %v1689 = vpow.pop %v1688
        %v1690 = vmul.f32 %v1628, 1.442695
        %v1691 = vpow.pop %v1690
        %v1692 = vmul.f32 %v1629, 1.442695
        %v1693 = vpow.pop %v1692
        %v1694 = vadd.f32 %v1631, %v1633
        %1695 = vadd.xlane.f32.xlu0 %v1694
        %v1696 = vpop.xlane.xlu0 %1695
        %v1697 = vadd.f32 %v1635, %v1637
        %1698 = vadd.xlane.f32.xlu0 %v1697
        %v1699 = vpop.xlane.xlu0 %1698
        %v1700 = vadd.f32 %v1639, %v1641
        %1701 = vadd.xlane.f32.xlu0 %v1700
        %v1702 = vpop.xlane.xlu0 %1701
        %v1703 = vadd.f32 %v1643, %v1645
        %1704 = vadd.xlane.f32.xlu0 %v1703
        %v1705 = vpop.xlane.xlu0 %1704
        %v1706 = vadd.f32 %v1647, %v1649
        %1707 = vadd.xlane.f32.xlu0 %v1706
        %v1708 = vpop.xlane.xlu0 %1707
        %v1709 = vadd.f32 %v1651, %v1653
        %1710 = vadd.xlane.f32.xlu0 %v1709
        %v1711 = vpop.xlane.xlu0 %1710
        %v1712 = vadd.f32 %v1655, %v1657
        %1713 = vadd.xlane.f32.xlu0 %v1712
        %v1714 = vpop.xlane.xlu0 %1713
        %v1715 = vadd.f32 %v1659, %v1661
        %1716 = vadd.xlane.f32.xlu0 %v1715
        %v1717 = vpop.xlane.xlu0 %1716
        %v1718 = vadd.f32 %v1663, %v1665
        %1719 = vadd.xlane.f32.xlu0 %v1718
        %v1720 = vpop.xlane.xlu0 %1719
        %v1721 = vadd.f32 %v1667, %v1669
        %1722 = vadd.xlane.f32.xlu0 %v1721
        %v1723 = vpop.xlane.xlu0 %1722
        %v1724 = vadd.f32 %v1671, %v1673
        %1725 = vadd.xlane.f32.xlu0 %v1724
        %v1726 = vpop.xlane.xlu0 %1725
        %v1727 = vadd.f32 %v1675, %v1677
        %1728 = vadd.xlane.f32.xlu0 %v1727
        %v1729 = vpop.xlane.xlu0 %1728
        %v1730 = vadd.f32 %v1679, %v1681
        %1731 = vadd.xlane.f32.xlu0 %v1730
        %v1732 = vpop.xlane.xlu0 %1731
        %v1733 = vadd.f32 %v1683, %v1685
        %1734 = vadd.xlane.f32.xlu0 %v1733
        %v1735 = vpop.xlane.xlu0 %1734
        %v1736 = vadd.f32 %v1687, %v1689
        %1737 = vadd.xlane.f32.xlu0 %v1736
        %v1738 = vpop.xlane.xlu0 %1737
        %v1739 = vadd.f32 %v1691, %v1693
        %1740 = vadd.xlane.f32.xlu0 %v1739
        %v1741 = vpop.xlane.xlu0 %1740
        %v1742 = vadd.f32 %v1696, 1e-08
        %v1743 = vadd.f32 %v1699, 1e-08
        %v1744 = vadd.f32 %v1702, 1e-08
        %v1745 = vadd.f32 %v1705, 1e-08
        %v1746 = vadd.f32 %v1708, 1e-08
        %v1747 = vadd.f32 %v1711, 1e-08
        %v1748 = vadd.f32 %v1714, 1e-08
        %v1749 = vadd.f32 %v1717, 1e-08
        %v1750 = vadd.f32 %v1720, 1e-08
        %v1751 = vadd.f32 %v1723, 1e-08
        %v1752 = vadd.f32 %v1726, 1e-08
        %v1753 = vadd.f32 %v1729, 1e-08
        %v1754 = vadd.f32 %v1732, 1e-08
        %v1755 = vadd.f32 %v1735, 1e-08
        %v1756 = vadd.f32 %v1738, 1e-08
        %v1757 = vadd.f32 %v1741, 1e-08
        %v1758 = vrcp.pop %v1742
        %v1759 = vrcp.pop %v1743
        %v1760 = vrcp.pop %v1744
        %v1761 = vrcp.pop %v1745
        %v1762 = vrcp.pop %v1746
        %v1763 = vrcp.pop %v1747
        %v1764 = vrcp.pop %v1748
        %v1765 = vrcp.pop %v1749
        %v1766 = vrcp.pop %v1750
        %v1767 = vrcp.pop %v1751
        %v1768 = vrcp.pop %v1752
        %v1769 = vrcp.pop %v1753
        %v1770 = vrcp.pop %v1754
        %v1771 = vrcp.pop %v1755
        %v1772 = vrcp.pop %v1756
        %v1773 = vrcp.pop %v1757
        %v1774 = vmul.f32 %v1631, %v1758
        %v1775 = vmul.f32 %v1633, %v1758
        %v1776 = vmul.f32 %v1635, %v1759
        %v1777 = vmul.f32 %v1637, %v1759
        %v1778 = vmul.f32 %v1639, %v1760
        %v1779 = vmul.f32 %v1641, %v1760
        %v1780 = vmul.f32 %v1643, %v1761
        %v1781 = vmul.f32 %v1645, %v1761
        %v1782 = vmul.f32 %v1647, %v1762
        %v1783 = vmul.f32 %v1649, %v1762
        %v1784 = vmul.f32 %v1651, %v1763
        %v1785 = vmul.f32 %v1653, %v1763
        %v1786 = vmul.f32 %v1655, %v1764
        %v1787 = vmul.f32 %v1657, %v1764
        %v1788 = vmul.f32 %v1659, %v1765
        %v1789 = vmul.f32 %v1661, %v1765
        %v1790 = vmul.f32 %v1663, %v1766
        %v1791 = vmul.f32 %v1665, %v1766
        %v1792 = vmul.f32 %v1667, %v1767
        %v1793 = vmul.f32 %v1669, %v1767
        %v1794 = vmul.f32 %v1671, %v1768
        %v1795 = vmul.f32 %v1673, %v1768
        %v1796 = vmul.f32 %v1675, %v1769
        %v1797 = vmul.f32 %v1677, %v1769
        %v1798 = vmul.f32 %v1679, %v1770
        %v1799 = vmul.f32 %v1681, %v1770
        %v1800 = vmul.f32 %v1683, %v1771
        %v1801 = vmul.f32 %v1685, %v1771
        %v1802 = vmul.f32 %v1687, %v1772
        %v1803 = vmul.f32 %v1689, %v1772
        %v1804 = vmul.f32 %v1691, %v1773
        %v1805 = vmul.f32 %v1693, %v1773
        %v1806 = vmul.f32 %v1009, 3.0
        %v1807 = vmul.f32 %v1010, 3.0
        %v1808 = vmul.f32 %v1011, 3.0
        %v1809 = vmul.f32 %v1012, 3.0
        %v1810 = vmul.f32 %v1013, 3.0
        %v1811 = vmul.f32 %v1014, 3.0
        %v1812 = vmul.f32 %v1015, 3.0
        %v1813 = vmul.f32 %v1016, 3.0
        %v1814 = vmul.f32 %v1017, 3.0
        %v1815 = vmul.f32 %v1018, 3.0
        %v1816 = vmul.f32 %v1019, 3.0
        %v1817 = vmul.f32 %v1020, 3.0
        %v1818 = vmul.f32 %v1021, 3.0
        %v1819 = vmul.f32 %v1022, 3.0
        %v1820 = vmul.f32 %v1023, 3.0
        %v1821 = vmul.f32 %v1024, 3.0
        %v1822 = vmul.f32 %v1025, 3.0
        %v1823 = vmul.f32 %v1026, 3.0
        %v1824 = vmul.f32 %v1027, 3.0
        %v1825 = vmul.f32 %v1028, 3.0
        %v1826 = vmul.f32 %v1029, 3.0
        %v1827 = vmul.f32 %v1030, 3.0
        %v1828 = vmul.f32 %v1031, 3.0
        %v1829 = vmul.f32 %v1032, 3.0
        %v1830 = vmul.f32 %v1033, 3.0
        %v1831 = vmul.f32 %v1034, 3.0
        %v1832 = vmul.f32 %v1035, 3.0
        %v1833 = vmul.f32 %v1036, 3.0
        %v1834 = vmul.f32 %v1037, 3.0
        %v1835 = vmul.f32 %v1038, 3.0
        %v1836 = vmul.f32 %v1039, 3.0
        %v1837 = vmul.f32 %v1040, 3.0
        %v1838 = vmul.f32 %v1774, 5.0
        %v1839 = vmul.f32 %v1775, 5.0
        %v1840 = vmul.f32 %v1776, 5.0
        %v1841 = vmul.f32 %v1777, 5.0
        %v1842 = vmul.f32 %v1778, 5.0
        %v1843 = vmul.f32 %v1779, 5.0
        %v1844 = vmul.f32 %v1780, 5.0
        %v1845 = vmul.f32 %v1781, 5.0
        %v1846 = vmul.f32 %v1782, 5.0
        %v1847 = vmul.f32 %v1783, 5.0
        %v1848 = vmul.f32 %v1784, 5.0
        %v1849 = vmul.f32 %v1785, 5.0
        %v1850 = vmul.f32 %v1786, 5.0
        %v1851 = vmul.f32 %v1787, 5.0
        %v1852 = vmul.f32 %v1788, 5.0
        %v1853 = vmul.f32 %v1789, 5.0
        %v1854 = vmul.f32 %v1790, 5.0
        %v1855 = vmul.f32 %v1791, 5.0
        %v1856 = vmul.f32 %v1792, 5.0
        %v1857 = vmul.f32 %v1793, 5.0
        %v1858 = vmul.f32 %v1794, 5.0
        %v1859 = vmul.f32 %v1795, 5.0
        %v1860 = vmul.f32 %v1796, 5.0
        %v1861 = vmul.f32 %v1797, 5.0
        %v1862 = vmul.f32 %v1798, 5.0
        %v1863 = vmul.f32 %v1799, 5.0
        %v1864 = vmul.f32 %v1800, 5.0
        %v1865 = vmul.f32 %v1801, 5.0
        %v1866 = vmul.f32 %v1802, 5.0
        %v1867 = vmul.f32 %v1803, 5.0
        %v1868 = vmul.f32 %v1804, 5.0
        %v1869 = vmul.f32 %v1805, 5.0
        %v1870 = vadd.f32 %v1806, %v1838
        %v1871 = vadd.f32 %v1807, %v1839
        %v1872 = vadd.f32 %v1808, %v1840
        %v1873 = vadd.f32 %v1809, %v1841
        %v1874 = vadd.f32 %v1810, %v1842
        %v1875 = vadd.f32 %v1811, %v1843
        %v1876 = vadd.f32 %v1812, %v1844
        %v1877 = vadd.f32 %v1813, %v1845
        %v1878 = vadd.f32 %v1814, %v1846
        %v1879 = vadd.f32 %v1815, %v1847
        %v1880 = vadd.f32 %v1816, %v1848
        %v1881 = vadd.f32 %v1817, %v1849
        %v1882 = vadd.f32 %v1818, %v1850
        %v1883 = vadd.f32 %v1819, %v1851
        %v1884 = vadd.f32 %v1820, %v1852
        %v1885 = vadd.f32 %v1821, %v1853
        %v1886 = vadd.f32 %v1822, %v1854
        %v1887 = vadd.f32 %v1823, %v1855
        %v1888 = vadd.f32 %v1824, %v1856
        %v1889 = vadd.f32 %v1825, %v1857
        %v1890 = vadd.f32 %v1826, %v1858
        %v1891 = vadd.f32 %v1827, %v1859
        %v1892 = vadd.f32 %v1828, %v1860
        %v1893 = vadd.f32 %v1829, %v1861
        %v1894 = vadd.f32 %v1830, %v1862
        %v1895 = vadd.f32 %v1831, %v1863
        %v1896 = vadd.f32 %v1832, %v1864
        %v1897 = vadd.f32 %v1833, %v1865
        %v1898 = vadd.f32 %v1834, %v1866
        %v1899 = vadd.f32 %v1835, %v1867
        %v1900 = vadd.f32 %v1836, %v1868
        %v1901 = vadd.f32 %v1837, %v1869
        %v1902 = vpack.c.bf16 %v1872, %v1870
        %v1903 = vpack.c.bf16 %v1873, %v1871
        %v1904 = vpack.c.bf16 %v1876, %v1874
        %v1905 = vpack.c.bf16 %v1877, %v1875
        %v1906 = vpack.c.bf16 %v1880, %v1878
        %v1907 = vpack.c.bf16 %v1881, %v1879
        %v1908 = vpack.c.bf16 %v1884, %v1882
        %v1909 = vpack.c.bf16 %v1885, %v1883
        %v1910 = vpack.c.bf16 %v1888, %v1886
        %v1911 = vpack.c.bf16 %v1889, %v1887
        %v1912 = vpack.c.bf16 %v1892, %v1890
        %v1913 = vpack.c.bf16 %v1893, %v1891
        %v1914 = vpack.c.bf16 %v1896, %v1894
        %v1915 = vpack.c.bf16 %v1897, %v1895
        %v1916 = vpack.c.bf16 %v1900, %v1898
        %v1917 = vpack.c.bf16 %v1901, %v1899
        %v1934 = vunpack.c.l.b16 %v1902
        %v1935 = vunpack.c.l.b16 %v1903
        %v1936 = vunpack.c.h.b16 %v1902
        %v1937 = vunpack.c.h.b16 %v1903
        %v1938 = vunpack.c.l.b16 %v1904
        %v1939 = vunpack.c.l.b16 %v1905
        %v1940 = vunpack.c.h.b16 %v1904
        %v1941 = vunpack.c.h.b16 %v1905
        %v1942 = vunpack.c.l.b16 %v1906
        %v1943 = vunpack.c.l.b16 %v1907
        %v1944 = vunpack.c.h.b16 %v1906
        %v1945 = vunpack.c.h.b16 %v1907
        %v1946 = vunpack.c.l.b16 %v1908
        %v1947 = vunpack.c.l.b16 %v1909
        %v1948 = vunpack.c.h.b16 %v1908
        %v1949 = vunpack.c.h.b16 %v1909
        %v1950 = vunpack.c.l.b16 %v1910
        %v1951 = vunpack.c.l.b16 %v1911
        %v1952 = vunpack.c.h.b16 %v1910
        %v1953 = vunpack.c.h.b16 %v1911
        %v1954 = vunpack.c.l.b16 %v1912
        %v1955 = vunpack.c.l.b16 %v1913
        %v1956 = vunpack.c.h.b16 %v1912
        %v1957 = vunpack.c.h.b16 %v1913
        %v1958 = vunpack.c.l.b16 %v1914
        %v1959 = vunpack.c.l.b16 %v1915
        %v1960 = vunpack.c.h.b16 %v1914
        %v1961 = vunpack.c.h.b16 %v1915
        %v1962 = vunpack.c.l.b16 %v1916
        %v1963 = vunpack.c.l.b16 %v1917
        %v1964 = vunpack.c.h.b16 %v1916
        %v1965 = vunpack.c.h.b16 %v1917
        %v1966 = vpack.c.b16 %v1935, %v1934
        %v1967 = vpack.c.b16 %v1937, %v1936
        %v1968 = vpack.c.b16 %v1939, %v1938
        %v1969 = vpack.c.b16 %v1941, %v1940
        %v1970 = vpack.c.b16 %v1943, %v1942
        %v1971 = vpack.c.b16 %v1945, %v1944
        %v1972 = vpack.c.b16 %v1947, %v1946
        %v1973 = vpack.c.b16 %v1949, %v1948
        %v1974 = vpack.c.b16 %v1951, %v1950
        %v1975 = vpack.c.b16 %v1953, %v1952
        %v1976 = vpack.c.b16 %v1955, %v1954
        %v1977 = vpack.c.b16 %v1957, %v1956
        %v1978 = vpack.c.b16 %v1959, %v1958
        %v1979 = vpack.c.b16 %v1961, %v1960
        %v1980 = vpack.c.b16 %v1963, %v1962
        %v1981 = vpack.c.b16 %v1965, %v1964
        %1998 = vst [vmem:[%s261] sm:$0xff] %v1966
        %1999 = vst [vmem:[%s261 + $0x8] sm:$0xff] %v1967
        %2000 = vst [vmem:[%s261 + $0x10] sm:$0xff] %v1968
        %2001 = vst [vmem:[%s261 + $0x18] sm:$0xff] %v1969
        %2002 = vst [vmem:[%s261 + $0x20] sm:$0xff] %v1970
        %2003 = vst [vmem:[%s261 + $0x28] sm:$0xff] %v1971
        %2004 = vst [vmem:[%s261 + $0x30] sm:$0xff] %v1972
        %2005 = vst [vmem:[%s261 + $0x38] sm:$0xff] %v1973
        %2006 = vst [vmem:[%s261 + $0x40] sm:$0xff] %v1974
        %2007 = vst [vmem:[%s261 + $0x48] sm:$0xff] %v1975
        %2008 = vst [vmem:[%s261 + $0x50] sm:$0xff] %v1976
        %2009 = vst [vmem:[%s261 + $0x58] sm:$0xff] %v1977
        %2010 = vst [vmem:[%s261 + $0x60] sm:$0xff] %v1978
        %2011 = vst [vmem:[%s261 + $0x68] sm:$0xff] %v1979
        %2012 = vst [vmem:[%s261 + $0x70] sm:$0xff] %v1980
        %2013 = vst [vmem:[%s261 + $0x78] sm:$0xff] %v1981
        %s2014 = sand.u32 %s164, 1
        %s2015 = scalar_lea.sflag [#allocation3], %s2014
        %s2016 = sand.u32 %s164, 1
        %s2017 = smul.addr %s2016, 128
        %s2018 = scalar_lea.vmem [#allocation2], %s2017
        // Predicated region
        $region45: #{tpu_custom_call.1} parent=43 // pred_check
          %p2019 = pneg %p174
        $region46: #{tpu_custom_call.1} parent=43 // pred_check_branch
          %2021 = sbr.rel (%p2019) target = $region48
        $region47: #{tpu_custom_call.1} parent=43 // pred_region
          %s2022 = smul.u32 16, %s20
          %s2024 = ssub.s32 2048, 2048
          %2025 = vsyncadd %s2015, %s2024
          %s2026 = smul.addr %s2022, 2
          %s2027 = smul.addr %s2026, 64
          %s2028 = scalar_lea.hbm %s6, %s2027
          %s2029 = sshll.u32 %s2018, 4
          %s2030 = int_to_ptr.vmem [resolvable:$true] %s2029
          %2035 = dma.vmem_to_hbm [thread:$0]  %s2030, 2048, %s2028, %s2015, 128, 128, 8
        $region48: #{tpu_custom_call.1} parent=43 // pred_fallthru
          _
      $region44: #{tpu_custom_call.1} parent=5 // pred_fallthru
        _
      %p2036 = scmp.le.s32.totalorder 2, %s15
      // Predicated region
      $region49: #{tpu_custom_call.1} parent=5 // pred_check
        %p2037 = pneg %p2036
      $region50: #{tpu_custom_call.1} parent=5 // pred_check_branch
        %2039 = sbr.rel (%p2037) target = $region52
      $region51: #{tpu_custom_call.1} parent=5 // pred_region
        %s2040 = ssub.s32 %s15, 2
        // Predicated region
        $region53: #{tpu_custom_call.1} parent=51 // pred_check
          %p2041 = pneg %p180
        $region54: #{tpu_custom_call.1} parent=51 // pred_check_branch
          %2043 = sbr.rel (%p2041) target = $region56
        $region55: #{tpu_custom_call.1} parent=51 // pred_region
          %s2044 = sand.u32 %s165, 1
          %s2045 = scalar_lea.sflag [#allocation3], %s2044
          %s2046 = sand.u32 %s165, 1
          %s2047 = smul.addr %s2046, 128
          %s2048 = scalar_lea.vmem [#allocation2], %s2047
          %2049 = dma.done %s2045, 2048
        $region56: #{tpu_custom_call.1} parent=51 // pred_fallthru
          _
      $region52: #{tpu_custom_call.1} parent=5 // pred_fallthru
        _
    $region6: #{tpu_custom_call.1} parent=1 // loop_footer
      %s19 = sadd.s32 1, %s15
    $region7: #{tpu_custom_call.1} parent=1 // loop_footer_branch
      %14 = sbr.rel target = $region3
    $region8: #{tpu_custom_call.1} parent=1 // loop_exit
      _
    %2050 = vsyncpa [#allocation3], 1
    %s2051 = scalar_lea.sflag [#allocation3], 1
    %2052 = vsyncpa %s2051, 1

</llo_original>
